<compile_context>
chip_gen: v7x
topology: tpu7x:2x2x1
jax: 0.10.0
libtpu: 0.0.40
codegen_flags: <defaults>
</compile_context>

<pallas_src>
import functools

import jax
import jax.numpy as jnp
from jax import lax
from jax.experimental import pallas as pl
from jax.experimental.pallas import tpu as pltpu


# ----------------------------------------------------------------------------
# Pallas kernel
# ----------------------------------------------------------------------------
def _wavenet_block_kernel(K, D, PAD, HALO_BLK, T_true, gate_bf16,
                          x_ref,       # [B_blk, C, T_tile]    current time tile
                          lh_ref,      # [B_blk, C, HALO_BLK]  chunk left of tile
                          rh_ref,      # [B_blk, C, HALO_BLK]  chunk right of tile
                          proj_ref,    # [B, C, 1]              embed projection (resident)
                          w_conv_ref,  # [2C, K*C] bf16         stacked dilated taps
                          b_conv_ref,  # [2C, 1]   f32
                          w_rs_ref,    # [2C, C]   bf16         fused res|skip 1x1
                          b_rs_ref,    # [2C, 1]   f32
                          res_ref,     # [B_blk, C, T_tile]     out
                          skip_ref,    # [B_blk, C, T_tile]     out
                          xwin,        # VMEM [B_blk, C, T_tile + 2*HALO_BLK] bf16
                          xstack):     # VMEM [K*C, B_blk*T_tile] bf16
    BB, C, TT = x_ref.shape
    t = pl.program_id(1)
    nt = pl.num_programs(1)
    last = nt - 1
    b0 = pl.program_id(0) * BB
    OFF = HALO_BLK                                    # lane-aligned interior offset
    rem = T_true % TT                                 # static: 0 => tiles divide exactly

    # ---- build the haloed window per batch row: x + proj_embed(embed) ------
    for bi in range(BB):
        proj = proj_ref[b0 + bi]                      # [C, 1] f32 (resident in VMEM)

        # interior (unmasked; the out-of-signal tail of the last tile is zeroed below)
        xwin[bi, :, OFF:OFF + TT] = (x_ref[bi] + proj).astype(xwin.dtype)

        if PAD > 0:
            # left halo: only the PAD columns adjacent to the tile are used.
            # At t == 0 these columns are the conv's "same" zero padding.
            lh = lh_ref[bi][:, HALO_BLK - PAD:]       # [C, PAD]
            xwin[bi, :, OFF - PAD:OFF] = jnp.where(
                t > 0, lh + proj, 0.0).astype(xwin.dtype)

            # right halo: columns past the true signal length must be zero.
            rh = rh_ref[bi][:, :PAD]                  # [C, PAD]
            if rem == 0:
                xwin[bi, :, OFF + TT:OFF + TT + PAD] = jnp.where(
                    t < last, rh + proj, 0.0).astype(xwin.dtype)
            else:
                gr = lax.broadcasted_iota(jnp.int32, (1, PAD), 1) + (t + 1) * TT
                xwin[bi, :, OFF + TT:OFF + TT + PAD] = jnp.where(
                    gr < T_true, rh + proj, 0.0).astype(xwin.dtype)

    # ---- last tile only: zero the out-of-signal interior suffix ------------
    if rem != 0:
        @pl.when(t == last)
        def _():
            xwin[:, :, OFF + rem:OFF + TT] = jnp.zeros((BB, C, TT - rem), xwin.dtype)

    # ---- stack K dilated taps -> one [2C, K*C] x [K*C, BB*TT] MXU matmul ----
    for bi in range(BB):                              # static unroll, BB and K small
        base = bi * TT
        for k in range(K):
            s = OFF - PAD + k * D
            xstack[k * C:(k + 1) * C, base:base + TT] = xwin[bi, :, s:s + TT]

    y = jnp.dot(w_conv_ref[...], xstack[...],
                preferred_element_type=jnp.float32) + b_conv_ref[...]   # [2C, BB*TT]

    # ---- gated activation (EUP); bf16 on v6e/v7x, f32 otherwise ------------
    if gate_bf16:
        yb = y.astype(jnp.bfloat16)
        z = jax.nn.sigmoid(yb[:C, :]) * jnp.tanh(yb[C:, :])             # [C, BB*TT] bf16
        zb = z
    else:
        z = jax.nn.sigmoid(y[:C, :]) * jnp.tanh(y[C:, :])               # [C, BB*TT] f32
        zb = z.astype(jnp.bfloat16)

    # ---- fused residual / skip 1x1 convolutions -----------------------------
    rs = jnp.dot(w_rs_ref[...], zb,
                 preferred_element_type=jnp.float32) + b_rs_ref[...]    # [2C, BB*TT]

    scale = jnp.float32(2.0 ** -0.5)
    for bi in range(BB):
        base = bi * TT
        res_ref[bi] = ((z[:, base:base + TT] + rs[:C, base:base + TT])
                       * scale).astype(res_ref.dtype)
        skip_ref[bi] = rs[C:, base:base + TT].astype(skip_ref.dtype)


# ----------------------------------------------------------------------------
# Wrapper helpers
# ----------------------------------------------------------------------------
def _round_up(a, m):
    return -(-a // m) * m


def _device_kind():
    try:
        return jax.devices()[0].device_kind.lower()
    except Exception:
        return ""


def _vmem_budget_bytes(kind):
    # v5e / v6e: 128 MiB physical VMEM -> generous 64 MiB budget.
    # v7x / unknown: 64 MiB physical -> conservative 40 MiB keeps 2-deep pipelining.
    if ("v5" in kind) or ("v6" in kind):
        return 64 * (1 << 20)
    return 40 * (1 << 20)


def _estimate_vmem_bytes(BB, TT, HB, B, C, K, out_bytes, gate_bytes):
    est = 2 * BB * C * TT * 4                       # x tile, double-buffered f32
    est += 2 * 2 * BB * C * HB * 4                  # left + right halo blocks
    est += 2 * 2 * BB * C * TT * out_bytes          # res + skip output blocks
    est += 2 * B * C * 4                            # resident proj
    est += 2 * (2 * C * K * C * 2 + 2 * C * C * 2 + 4 * 2 * C * 4)  # weights/biases
    est += BB * C * (TT + 2 * HB) * 2               # xwin scratch (bf16)
    est += K * C * BB * TT * 2                      # xstack scratch (bf16)
    est += BB * TT * C * (8 + gate_bytes + 8)       # y, z, rs temporaries
    return est


# ----------------------------------------------------------------------------
# Wrapper
# ----------------------------------------------------------------------------
def wavenet_block(inputs, embed, params, *, kernels, dilations,
                  t_tile=None, out_dtype=None, gate_bf16=None):
    """inputs: [B, C, T] f32, embed: [B, E] f32 -> (res [B,C,T], skip [B,C,T])."""
    B, C, T = inputs.shape
    K, D = kernels, dilations
    assert (K - 1) * D % 2 == 0, "(kernels-1)*dilations must be even for same-length output"
    PAD = (K - 1) * D // 2

    kind = _device_kind()
    if gate_bf16 is None:
        gate_bf16 = ("v6" in kind) or ("v7" in kind)   # bf16 VPU/EUP generations
    if out_dtype is None:
        out_dtype = inputs.dtype                       # module semantics: f32 outputs
    out_bytes = jnp.dtype(out_dtype).itemsize
    gate_bytes = 2 if gate_bf16 else 4

    # halo chunks are 128-lane-aligned blocks; the time tile is a multiple of them
    HALO_BLK = max(128, _round_up(max(PAD, 1), 128))
    TT_cap = _round_up(T, HALO_BLK)
    if t_tile is None:
        T_tile = min(TT_cap, _round_up(max(8 * HALO_BLK, 1024), HALO_BLK))
    else:
        T_tile = min(TT_cap, _round_up(max(t_tile, HALO_BLK), HALO_BLK))

    budget = _vmem_budget_bytes(kind)
    # shrink T_tile until a single batch row fits the per-generation budget
    while T_tile > HALO_BLK and _estimate_vmem_bytes(
            1, T_tile, HALO_BLK, B, C, K, out_bytes, gate_bytes) > budget:
        T_tile -= HALO_BLK
    # fold as many batch rows per step as fit (divisor of B)
    B_blk = 1
    for cand in range(B, 0, -1):
        if B % cand == 0 and _estimate_vmem_bytes(
                cand, T_tile, HALO_BLK, B, C, K, out_bytes, gate_bytes) <= budget:
            B_blk = cand
            break

    NT = -(-T // T_tile)
    NB = B // B_blk
    R = T_tile // HALO_BLK
    NH = -(-T // HALO_BLK)                             # halo blocks over the unpadded T

    # ---- host-side parameter repacking (once) -------------------------------
    w_conv = params["w_conv_oih"]                                      # [2C, C, K]
    w_conv_s = jnp.transpose(w_conv, (0, 2, 1)).reshape(2 * C, K * C).astype(jnp.bfloat16)
    b_conv = params["b_conv"].astype(jnp.float32)                      # [2C, 1]
    w_rs = jnp.concatenate([params["w_res"], params["w_skip"]], axis=0).astype(jnp.bfloat16)
    b_rs = jnp.concatenate([params["b_res"], params["b_skip"]], axis=0).astype(jnp.float32)

    # embedding projection is time-independent: hoist it out of the kernel
    proj = (embed @ params["w_embed"].T)[..., None].astype(jnp.float32)  # [B, C, 1]

    kern = functools.partial(_wavenet_block_kernel, K, D, PAD, HALO_BLK, T, gate_bf16)

    def full_spec(shape):
        return pl.BlockSpec(shape, lambda b, t, _n=len(shape): (0,) * _n)

    res, skip = pl.pallas_call(
        kern,
        out_shape=(jax.ShapeDtypeStruct((B, C, T), out_dtype),
                   jax.ShapeDtypeStruct((B, C, T), out_dtype)),
        grid_spec=pltpu.PrefetchScalarGridSpec(
            num_scalar_prefetch=0,
            grid=(NB, NT),
            in_specs=[
                # main tile (last block may hang off the edge; tail masked in-kernel)
                pl.BlockSpec((B_blk, C, T_tile), lambda b, t: (b, 0, t)),
                # left halo: clamp to block 0 at t == 0 (masked in-kernel)
                pl.BlockSpec((B_blk, C, HALO_BLK),
                             lambda b, t: (b, 0, jnp.maximum(t * R - 1, 0))),
                # right halo: clamp to the last valid halo block (masked in-kernel)
                pl.BlockSpec((B_blk, C, HALO_BLK),
                             lambda b, t: (b, 0, jnp.minimum((t + 1) * R, NH - 1))),
                # proj stays resident in VMEM (constant block index -> no per-step DMA)
                pl.BlockSpec((B, C, 1), lambda b, t: (0, 0, 0)),
                full_spec((2 * C, K * C)),                              # conv weight
                full_spec((2 * C, 1)),                                  # conv bias
                full_spec((2 * C, C)),                                  # res|skip weight
                full_spec((2 * C, 1)),                                  # res|skip bias
            ],
            out_specs=[
                pl.BlockSpec((B_blk, C, T_tile), lambda b, t: (b, 0, t)),
                pl.BlockSpec((B_blk, C, T_tile), lambda b, t: (b, 0, t)),
            ],
            scratch_shapes=[
                pltpu.VMEM((B_blk, C, T_tile + 2 * HALO_BLK), jnp.bfloat16),  # haloed window
                pltpu.VMEM((K * C, B_blk * T_tile), jnp.bfloat16),            # stacked taps
            ],
        ),
        compiler_params=pltpu.CompilerParams(
            dimension_semantics=("parallel", "parallel"),
            vmem_limit_bytes=int(budget)),
    )(inputs, inputs, inputs, proj, w_conv_s, b_conv, w_rs, b_rs)

    return res, skip


# ----------------------------------------------------------------------------
# Parameter setup (deterministic) — weight-norm: w = g * v / ||v||_{dims != 0}
# ----------------------------------------------------------------------------
def _weight_norm(v, g):
    axes = tuple(range(1, v.ndim))
    norm = jnp.sqrt(jnp.sum(v * v, axis=axes, keepdims=True))
    return g.reshape((-1,) + (1,) * (v.ndim - 1)) * v / norm


def make_params(key, channels, embed, kernels):
    C, E, K = channels, embed, kernels
    ks = jax.random.split(key, 8)
    v_conv = jax.random.normal(ks[0], (2 * C, C, K), jnp.float32) * 0.3
    g_conv = jax.random.uniform(ks[1], (2 * C,), jnp.float32, 0.5, 1.5)
    v_embed = jax.random.normal(ks[2], (C, E), jnp.float32) * 0.3
    g_embed = jax.random.uniform(ks[3], (C,), jnp.float32, 0.5, 1.5)
    v_res = jax.random.normal(ks[4], (C, C, 1), jnp.float32) * 0.3
    g_res = jax.random.uniform(ks[5], (C,), jnp.float32, 0.5, 1.5)
    v_skip = jax.random.normal(ks[6], (C, C, 1), jnp.float32) * 0.3
    g_skip = jax.random.uniform(ks[7], (C,), jnp.float32, 0.5, 1.5)

    return {
        "w_embed": _weight_norm(v_embed, g_embed),                     # [C, E]
        "w_conv_oih": _weight_norm(v_conv, g_conv),                    # [2C, C, K]
        "b_conv": jnp.linspace(-0.1, 0.1, 2 * C, dtype=jnp.float32)[:, None],
        "w_res": _weight_norm(v_res, g_res)[:, :, 0],                  # [C, C]
        "b_res": jnp.linspace(-0.05, 0.05, C, dtype=jnp.float32)[:, None],
        "w_skip": _weight_norm(v_skip, g_skip)[:, :, 0],               # [C, C]
        "b_skip": jnp.linspace(0.05, -0.05, C, dtype=jnp.float32)[:, None],
    }


# ----------------------------------------------------------------------------
# Pure-JAX reference (for correctness check)
# ----------------------------------------------------------------------------
def reference(inputs, embed, params, *, kernels, dilations):
    K, D = kernels, dilations
    pad = (K - 1) * D // 2
    x = inputs + (embed @ params["w_embed"].T)[..., None]
    y = lax.conv_general_dilated(
        x, params["w_conv_oih"],
        window_strides=(1,), padding=[(pad, pad)], rhs_dilation=(D,),
        dimension_numbers=("NCH", "OIH", "NCH"),
    ) + params["b_conv"][None, :, :]
    gate, context = jnp.split(y, 2, axis=1)
    z = jax.nn.sigmoid(gate) * jnp.tanh(context)
    res_lin = jnp.einsum("oc,bct->bot", params["w_res"], z) + params["b_res"][None]
    skip_lin = jnp.einsum("oc,bct->bot", params["w_skip"], z) + params["b_skip"][None]
    return (z + res_lin) * (2.0 ** -0.5), skip_lin


# ----------------------------------------------------------------------------
if __name__ == "__main__":
    B, C, E, T = 2, 8, 16, 320
    kernels, dilations = 3, 2          # (K-1)*D = 4 -> "same" padding = 2

    key = jax.random.PRNGKey(0)
    k_in, k_emb, k_par = jax.random.split(key, 3)
    inputs = jax.random.normal(k_in, (B, C, T), jnp.float32)
    embed = jax.random.normal(k_emb, (B, E), jnp.float32)
    params = make_params(k_par, C, E, kernels)

    res_ref, skip_ref = reference(inputs, embed, params,
                                  kernels=kernels, dilations=dilations)

    # config A: t_tile=128 forces 3 time tiles so halo clamping, boundary masking,
    # and the last-tile tail path are all exercised.
    # config B: default tiling -> a single tile per batch row (rem != 0, NT == 1).
    for tt in (128, None):
        res, skip = wavenet_block(inputs, embed, params,
                                  kernels=kernels, dilations=dilations, t_tile=tt)
        res = jax.block_until_ready(res)
        skip = jax.block_until_ready(skip)

        assert res.shape == (B, C, T) and skip.shape == (B, C, T)
        # bf16 MXU operands with f32 accumulation -> loosened tolerance vs f32 reference
        assert jnp.allclose(res, res_ref, rtol=5e-2, atol=5e-2), f"residual mismatch (t_tile={tt})"
        assert jnp.allclose(skip, skip_ref, rtol=5e-2, atol=5e-2), f"skip mismatch (t_tile={tt})"

    print("KERNEL_OK")
</pallas_src>

<mosaic_0001>
module attributes {stable_mosaic.version = 11 : i64} {
  func.func @_wavenet_block_kernel(%arg0: i32, %arg1: i32, %arg2: memref<2x8x128xf32, #tpu.memory_space<vmem>>, %arg3: memref<2x8x128xf32, #tpu.memory_space<vmem>>, %arg4: memref<2x8x128xf32, #tpu.memory_space<vmem>>, %arg5: memref<2x8x1xf32, #tpu.memory_space<vmem>>, %arg6: memref<16x24xbf16, #tpu.memory_space<vmem>>, %arg7: memref<16x1xf32, #tpu.memory_space<vmem>>, %arg8: memref<16x8xbf16, #tpu.memory_space<vmem>>, %arg9: memref<16x1xf32, #tpu.memory_space<vmem>>, %arg10: memref<2x8x128xf32, #tpu.memory_space<vmem>>, %arg11: memref<2x8x128xf32, #tpu.memory_space<vmem>>, %arg12: memref<2x8x384xbf16, #tpu.memory_space<vmem>>, %arg13: memref<24x256xbf16, #tpu.memory_space<vmem>>) attributes {dimension_semantics = [#tpu.dimension_semantics<parallel>, #tpu.dimension_semantics<parallel>], iteration_bounds = array<i64: 1, 3>, scalar_prefetch = 0 : i64, scratch_operands = 2 : i64, tpu.core_type = #tpu.core_type<tc>, window_params = [{transform_indices = @transform_0, window_bounds = array<i64: 2, 8, 128>}, {transform_indices = @transform_1, window_bounds = array<i64: 2, 8, 128>}, {transform_indices = @transform_2, window_bounds = array<i64: 2, 8, 128>}, {pipeline_mode = #tpu.pipeline_mode<synchronous>, transform_indices = @transform_3, window_bounds = array<i64: 2, 8, 1>}, {pipeline_mode = #tpu.pipeline_mode<synchronous>, transform_indices = @transform_4, window_bounds = array<i64: 16, 24>}, {pipeline_mode = #tpu.pipeline_mode<synchronous>, transform_indices = @transform_5, window_bounds = array<i64: 16, 1>}, {pipeline_mode = #tpu.pipeline_mode<synchronous>, transform_indices = @transform_6, window_bounds = array<i64: 16, 8>}, {pipeline_mode = #tpu.pipeline_mode<synchronous>, transform_indices = @transform_7, window_bounds = array<i64: 16, 1>}, {transform_indices = @transform_8, window_bounds = array<i64: 2, 8, 128>}, {transform_indices = @transform_9, window_bounds = array<i64: 2, 8, 128>}]} {
    %c2_i32 = arith.constant 2 : i32
    %0 = arith.muli %arg0, %c2_i32 : i32
    %c0_i32 = arith.constant 0 : i32
    %1 = arith.addi %0, %c0_i32 : i32
    %2 = arith.index_cast %1 : i32 to index
    %c0 = arith.constant 0 : index
    %c0_0 = arith.constant 0 : index
    %3 = vector.load %arg5[%2, %c0, %c0_0] : memref<2x8x1xf32, #tpu.memory_space<vmem>>, vector<1x8x1xf32>
    %4 = vector.shape_cast %3 : vector<1x8x1xf32> to vector<8x1xf32>
    %c0_1 = arith.constant 0 : index
    %c0_2 = arith.constant 0 : index
    %c0_3 = arith.constant 0 : index
    %5 = vector.load %arg2[%c0_1, %c0_2, %c0_3] : memref<2x8x128xf32, #tpu.memory_space<vmem>>, vector<1x8x128xf32>
    %6 = vector.shape_cast %5 : vector<1x8x128xf32> to vector<8x128xf32>
    %7 = vector.broadcast %4 : vector<8x1xf32> to vector<8x128xf32>
    %8 = arith.addf %6, %7 : vector<8x128xf32>
    %9 = arith.truncf %8 : vector<8x128xf32> to vector<8x128xbf16>
    %c0_4 = arith.constant 0 : index
    %c0_5 = arith.constant 0 : index
    %c128 = arith.constant 128 : index
    %10 = vector.load %arg12[%c0_4, %c0_5, %c128] : memref<2x8x384xbf16, #tpu.memory_space<vmem>>, vector<1x8x128xbf16>
    %11 = vector.shape_cast %10 : vector<1x8x128xbf16> to vector<8x128xbf16>
    %12 = vector.shape_cast %9 : vector<8x128xbf16> to vector<1x8x128xbf16>
    tpu.vector_store %arg12[%c0_4, %c0_5, %c128], %12 {strides = array<i32>} : memref<2x8x384xbf16, #tpu.memory_space<vmem>>, vector<1x8x128xbf16>,
    %c0_6 = arith.constant 0 : index
    %c0_7 = arith.constant 0 : index
    %c0_8 = arith.constant 0 : index
    %13 = vector.load %arg3[%c0_6, %c0_7, %c0_8] : memref<2x8x128xf32, #tpu.memory_space<vmem>>, vector<1x8x128xf32>
    %14 = vector.shape_cast %13 : vector<1x8x128xf32> to vector<8x128xf32>
    %15 = vector.extract_strided_slice %14 {offsets = [0, 126], sizes = [8, 2], strides = [1, 1]} : vector<8x128xf32> to vector<8x2xf32>
    %c0_i32_9 = arith.constant 0 : i32
    %16 = arith.cmpi sgt, %arg1, %c0_i32_9 : i32
    %17 = vector.broadcast %4 : vector<8x1xf32> to vector<8x2xf32>
    %18 = arith.addf %15, %17 : vector<8x2xf32>
    %cst = arith.constant 0.000000e+00 : f32
    %19 = vector.broadcast %cst : f32 to vector<8x2xf32>
    %20 = arith.select %16, %18, %19 : vector<8x2xf32>
    %21 = arith.truncf %20 : vector<8x2xf32> to vector<8x2xbf16>
    %c0_10 = arith.constant 0 : index
    %c0_11 = arith.constant 0 : index
    %c126 = arith.constant 126 : index
    %22 = vector.load %arg12[%c0_10, %c0_11, %c126] : memref<2x8x384xbf16, #tpu.memory_space<vmem>>, vector<1x8x2xbf16>
    %23 = vector.shape_cast %22 : vector<1x8x2xbf16> to vector<8x2xbf16>
    %24 = vector.shape_cast %21 : vector<8x2xbf16> to vector<1x8x2xbf16>
    tpu.vector_store %arg12[%c0_10, %c0_11, %c126], %24 {strides = array<i32>} : memref<2x8x384xbf16, #tpu.memory_space<vmem>>, vector<1x8x2xbf16>,
    %c0_12 = arith.constant 0 : index
    %c0_13 = arith.constant 0 : index
    %c0_14 = arith.constant 0 : index
    %25 = vector.load %arg4[%c0_12, %c0_13, %c0_14] : memref<2x8x128xf32, #tpu.memory_space<vmem>>, vector<1x8x128xf32>
    %26 = vector.shape_cast %25 : vector<1x8x128xf32> to vector<8x128xf32>
    %27 = vector.extract_strided_slice %26 {offsets = [0, 0], sizes = [8, 2], strides = [1, 1]} : vector<8x128xf32> to vector<8x2xf32>
    %28 = tpu.iota {dimensions = array<i32: 1>} : vector<1x2xi32>
    %c1_i32 = arith.constant 1 : i32
    %29 = arith.addi %arg1, %c1_i32 : i32
    %c128_i32 = arith.constant 128 : i32
    %30 = arith.muli %29, %c128_i32 : i32
    %31 = vector.broadcast %30 : i32 to vector<1x2xi32>
    %32 = arith.addi %28, %31 : vector<1x2xi32>
    %c320_i32 = arith.constant 320 : i32
    %33 = vector.broadcast %c320_i32 : i32 to vector<1x2xi32>
    %34 = arith.cmpi slt, %32, %33 : vector<1x2xi32>
    %35 = vector.broadcast %4 : vector<8x1xf32> to vector<8x2xf32>
    %36 = arith.addf %27, %35 : vector<8x2xf32>
    %cst_15 = arith.constant 0.000000e+00 : f32
    %37 = vector.shape_cast %34 : vector<1x2xi1> to vector<1x2xi1>
    %38 = vector.broadcast %37 : vector<1x2xi1> to vector<8x2xi1>
    %39 = vector.broadcast %cst_15 : f32 to vector<8x2xf32>
    %40 = arith.select %38, %36, %39 : vector<8x2xi1>, vector<8x2xf32>
    %41 = arith.truncf %40 : vector<8x2xf32> to vector<8x2xbf16>
    %c0_16 = arith.constant 0 : index
    %c0_17 = arith.constant 0 : index
    %c256 = arith.constant 256 : index
    %42 = vector.load %arg12[%c0_16, %c0_17, %c256] : memref<2x8x384xbf16, #tpu.memory_space<vmem>>, vector<1x8x2xbf16>
    %43 = vector.shape_cast %42 : vector<1x8x2xbf16> to vector<8x2xbf16>
    %44 = vector.shape_cast %41 : vector<8x2xbf16> to vector<1x8x2xbf16>
    tpu.vector_store %arg12[%c0_16, %c0_17, %c256], %44 {strides = array<i32>} : memref<2x8x384xbf16, #tpu.memory_space<vmem>>, vector<1x8x2xbf16>,
    %c1_i32_18 = arith.constant 1 : i32
    %45 = arith.addi %0, %c1_i32_18 : i32
    %46 = arith.index_cast %45 : i32 to index
    %c0_19 = arith.constant 0 : index
    %c0_20 = arith.constant 0 : index
    %47 = vector.load %arg5[%46, %c0_19, %c0_20] : memref<2x8x1xf32, #tpu.memory_space<vmem>>, vector<1x8x1xf32>
    %48 = vector.shape_cast %47 : vector<1x8x1xf32> to vector<8x1xf32>
    %c1 = arith.constant 1 : index
    %c0_21 = arith.constant 0 : index
    %c0_22 = arith.constant 0 : index
    %49 = vector.load %arg2[%c1, %c0_21, %c0_22] : memref<2x8x128xf32, #tpu.memory_space<vmem>>, vector<1x8x128xf32>
    %50 = vector.shape_cast %49 : vector<1x8x128xf32> to vector<8x128xf32>
    %51 = vector.broadcast %48 : vector<8x1xf32> to vector<8x128xf32>
    %52 = arith.addf %50, %51 : vector<8x128xf32>
    %53 = arith.truncf %52 : vector<8x128xf32> to vector<8x128xbf16>
    %c1_23 = arith.constant 1 : index
    %c0_24 = arith.constant 0 : index
    %c128_25 = arith.constant 128 : index
    %54 = vector.load %arg12[%c1_23, %c0_24, %c128_25] : memref<2x8x384xbf16, #tpu.memory_space<vmem>>, vector<1x8x128xbf16>
    %55 = vector.shape_cast %54 : vector<1x8x128xbf16> to vector<8x128xbf16>
    %56 = vector.shape_cast %53 : vector<8x128xbf16> to vector<1x8x128xbf16>
    tpu.vector_store %arg12[%c1_23, %c0_24, %c128_25], %56 {strides = array<i32>} : memref<2x8x384xbf16, #tpu.memory_space<vmem>>, vector<1x8x128xbf16>,
    %c1_26 = arith.constant 1 : index
    %c0_27 = arith.constant 0 : index
    %c0_28 = arith.constant 0 : index
    %57 = vector.load %arg3[%c1_26, %c0_27, %c0_28] : memref<2x8x128xf32, #tpu.memory_space<vmem>>, vector<1x8x128xf32>
    %58 = vector.shape_cast %57 : vector<1x8x128xf32> to vector<8x128xf32>
    %59 = vector.extract_strided_slice %58 {offsets = [0, 126], sizes = [8, 2], strides = [1, 1]} : vector<8x128xf32> to vector<8x2xf32>
    %c0_i32_29 = arith.constant 0 : i32
    %60 = arith.cmpi sgt, %arg1, %c0_i32_29 : i32
    %61 = vector.broadcast %48 : vector<8x1xf32> to vector<8x2xf32>
    %62 = arith.addf %59, %61 : vector<8x2xf32>
    %cst_30 = arith.constant 0.000000e+00 : f32
    %63 = vector.broadcast %cst_30 : f32 to vector<8x2xf32>
    %64 = arith.select %60, %62, %63 : vector<8x2xf32>
    %65 = arith.truncf %64 : vector<8x2xf32> to vector<8x2xbf16>
    %c1_31 = arith.constant 1 : index
    %c0_32 = arith.constant 0 : index
    %c126_33 = arith.constant 126 : index
    %66 = vector.load %arg12[%c1_31, %c0_32, %c126_33] : memref<2x8x384xbf16, #tpu.memory_space<vmem>>, vector<1x8x2xbf16>
    %67 = vector.shape_cast %66 : vector<1x8x2xbf16> to vector<8x2xbf16>
    %68 = vector.shape_cast %65 : vector<8x2xbf16> to vector<1x8x2xbf16>
    tpu.vector_store %arg12[%c1_31, %c0_32, %c126_33], %68 {strides = array<i32>} : memref<2x8x384xbf16, #tpu.memory_space<vmem>>, vector<1x8x2xbf16>,
    %c1_34 = arith.constant 1 : index
    %c0_35 = arith.constant 0 : index
    %c0_36 = arith.constant 0 : index
    %69 = vector.load %arg4[%c1_34, %c0_35, %c0_36] : memref<2x8x128xf32, #tpu.memory_space<vmem>>, vector<1x8x128xf32>
    %70 = vector.shape_cast %69 : vector<1x8x128xf32> to vector<8x128xf32>
    %71 = vector.extract_strided_slice %70 {offsets = [0, 0], sizes = [8, 2], strides = [1, 1]} : vector<8x128xf32> to vector<8x2xf32>
    %72 = tpu.iota {dimensions = array<i32: 1>} : vector<1x2xi32>
    %c1_i32_37 = arith.constant 1 : i32
    %73 = arith.addi %arg1, %c1_i32_37 : i32
    %c128_i32_38 = arith.constant 128 : i32
    %74 = arith.muli %73, %c128_i32_38 : i32
    %75 = vector.broadcast %74 : i32 to vector<1x2xi32>
    %76 = arith.addi %72, %75 : vector<1x2xi32>
    %c320_i32_39 = arith.constant 320 : i32
    %77 = vector.broadcast %c320_i32_39 : i32 to vector<1x2xi32>
    %78 = arith.cmpi slt, %76, %77 : vector<1x2xi32>
    %79 = vector.broadcast %48 : vector<8x1xf32> to vector<8x2xf32>
    %80 = arith.addf %71, %79 : vector<8x2xf32>
    %cst_40 = arith.constant 0.000000e+00 : f32
    %81 = vector.shape_cast %78 : vector<1x2xi1> to vector<1x2xi1>
    %82 = vector.broadcast %81 : vector<1x2xi1> to vector<8x2xi1>
    %83 = vector.broadcast %cst_40 : f32 to vector<8x2xf32>
    %84 = arith.select %82, %80, %83 : vector<8x2xi1>, vector<8x2xf32>
    %85 = arith.truncf %84 : vector<8x2xf32> to vector<8x2xbf16>
    %c1_41 = arith.constant 1 : index
    %c0_42 = arith.constant 0 : index
    %c256_43 = arith.constant 256 : index
    %86 = vector.load %arg12[%c1_41, %c0_42, %c256_43] : memref<2x8x384xbf16, #tpu.memory_space<vmem>>, vector<1x8x2xbf16>
    %87 = vector.shape_cast %86 : vector<1x8x2xbf16> to vector<8x2xbf16>
    %88 = vector.shape_cast %85 : vector<8x2xbf16> to vector<1x8x2xbf16>
    tpu.vector_store %arg12[%c1_41, %c0_42, %c256_43], %88 {strides = array<i32>} : memref<2x8x384xbf16, #tpu.memory_space<vmem>>, vector<1x8x2xbf16>,
    %c2_i32_44 = arith.constant 2 : i32
    %89 = arith.cmpi eq, %arg1, %c2_i32_44 : i32
    %90 = arith.extui %89 : i1 to i32
    %c0_i32_45 = arith.constant 0 : i32
    %91 = arith.cmpi ne, %90, %c0_i32_45 : i32
    scf.if %91 {
      %cst_100 = arith.constant 0.000000e+00 : bf16
      %155 = vector.broadcast %cst_100 : bf16 to vector<2x8x64xbf16>
      %c0_101 = arith.constant 0 : index
      %c0_102 = arith.constant 0 : index
      %c192 = arith.constant 192 : index
      %156 = vector.load %arg12[%c0_101, %c0_102, %c192] : memref<2x8x384xbf16, #tpu.memory_space<vmem>>, vector<2x8x64xbf16>
      tpu.vector_store %arg12[%c0_101, %c0_102, %c192], %155 {strides = array<i32>} : memref<2x8x384xbf16, #tpu.memory_space<vmem>>, vector<2x8x64xbf16>,
    } else {
    }
    %c0_46 = arith.constant 0 : index
    %c0_47 = arith.constant 0 : index
    %c126_48 = arith.constant 126 : index
    %92 = vector.load %arg12[%c0_46, %c0_47, %c126_48] : memref<2x8x384xbf16, #tpu.memory_space<vmem>>, vector<1x8x128xbf16>
    %93 = vector.shape_cast %92 : vector<1x8x128xbf16> to vector<8x128xbf16>
    %c0_49 = arith.constant 0 : index
    %c0_50 = arith.constant 0 : index
    %94 = vector.load %arg13[%c0_49, %c0_50] : memref<24x256xbf16, #tpu.memory_space<vmem>>, vector<8x128xbf16>
    tpu.vector_store %arg13[%c0_49, %c0_50], %93 {strides = array<i32>} : memref<24x256xbf16, #tpu.memory_space<vmem>>, vector<8x128xbf16>,
    %c0_51 = arith.constant 0 : index
    %c0_52 = arith.constant 0 : index
    %c128_53 = arith.constant 128 : index
    %95 = vector.load %arg12[%c0_51, %c0_52, %c128_53] : memref<2x8x384xbf16, #tpu.memory_space<vmem>>, vector<1x8x128xbf16>
    %96 = vector.shape_cast %95 : vector<1x8x128xbf16> to vector<8x128xbf16>
    %c8 = arith.constant 8 : index
    %c0_54 = arith.constant 0 : index
    %97 = vector.load %arg13[%c8, %c0_54] : memref<24x256xbf16, #tpu.memory_space<vmem>>, vector<8x128xbf16>
    tpu.vector_store %arg13[%c8, %c0_54], %96 {strides = array<i32>} : memref<24x256xbf16, #tpu.memory_space<vmem>>, vector<8x128xbf16>,
    %c0_55 = arith.constant 0 : index
    %c0_56 = arith.constant 0 : index
    %c130 = arith.constant 130 : index
    %98 = vector.load %arg12[%c0_55, %c0_56, %c130] : memref<2x8x384xbf16, #tpu.memory_space<vmem>>, vector<1x8x128xbf16>
    %99 = vector.shape_cast %98 : vector<1x8x128xbf16> to vector<8x128xbf16>
    %c16 = arith.constant 16 : index
    %c0_57 = arith.constant 0 : index
    %100 = vector.load %arg13[%c16, %c0_57] : memref<24x256xbf16, #tpu.memory_space<vmem>>, vector<8x128xbf16>
    tpu.vector_store %arg13[%c16, %c0_57], %99 {strides = array<i32>} : memref<24x256xbf16, #tpu.memory_space<vmem>>, vector<8x128xbf16>,
    %c1_58 = arith.constant 1 : index
    %c0_59 = arith.constant 0 : index
    %c126_60 = arith.constant 126 : index
    %101 = vector.load %arg12[%c1_58, %c0_59, %c126_60] : memref<2x8x384xbf16, #tpu.memory_space<vmem>>, vector<1x8x128xbf16>
    %102 = vector.shape_cast %101 : vector<1x8x128xbf16> to vector<8x128xbf16>
    %c0_61 = arith.constant 0 : index
    %c128_62 = arith.constant 128 : index
    %103 = vector.load %arg13[%c0_61, %c128_62] : memref<24x256xbf16, #tpu.memory_space<vmem>>, vector<8x128xbf16>
    tpu.vector_store %arg13[%c0_61, %c128_62], %102 {strides = array<i32>} : memref<24x256xbf16, #tpu.memory_space<vmem>>, vector<8x128xbf16>,
    %c1_63 = arith.constant 1 : index
    %c0_64 = arith.constant 0 : index
    %c128_65 = arith.constant 128 : index
    %104 = vector.load %arg12[%c1_63, %c0_64, %c128_65] : memref<2x8x384xbf16, #tpu.memory_space<vmem>>, vector<1x8x128xbf16>
    %105 = vector.shape_cast %104 : vector<1x8x128xbf16> to vector<8x128xbf16>
    %c8_66 = arith.constant 8 : index
    %c128_67 = arith.constant 128 : index
    %106 = vector.load %arg13[%c8_66, %c128_67] : memref<24x256xbf16, #tpu.memory_space<vmem>>, vector<8x128xbf16>
    tpu.vector_store %arg13[%c8_66, %c128_67], %105 {strides = array<i32>} : memref<24x256xbf16, #tpu.memory_space<vmem>>, vector<8x128xbf16>,
    %c1_68 = arith.constant 1 : index
    %c0_69 = arith.constant 0 : index
    %c130_70 = arith.constant 130 : index
    %107 = vector.load %arg12[%c1_68, %c0_69, %c130_70] : memref<2x8x384xbf16, #tpu.memory_space<vmem>>, vector<1x8x128xbf16>
    %108 = vector.shape_cast %107 : vector<1x8x128xbf16> to vector<8x128xbf16>
    %c16_71 = arith.constant 16 : index
    %c128_72 = arith.constant 128 : index
    %109 = vector.load %arg13[%c16_71, %c128_72] : memref<24x256xbf16, #tpu.memory_space<vmem>>, vector<8x128xbf16>
    tpu.vector_store %arg13[%c16_71, %c128_72], %108 {strides = array<i32>} : memref<24x256xbf16, #tpu.memory_space<vmem>>, vector<8x128xbf16>,
    %c0_73 = arith.constant 0 : index
    %c0_74 = arith.constant 0 : index
    %110 = vector.load %arg6[%c0_73, %c0_74] : memref<16x24xbf16, #tpu.memory_space<vmem>>, vector<16x24xbf16>
    %c0_75 = arith.constant 0 : index
    %c0_76 = arith.constant 0 : index
    %111 = vector.load %arg13[%c0_75, %c0_76] : memref<24x256xbf16, #tpu.memory_space<vmem>>, vector<24x256xbf16>
    %cst_77 = arith.constant dense<0.000000e+00> : vector<16x256xf32>
    %112 = tpu.matmul %110, %111, %cst_77 {dimension_numbers = #tpu.dot_dimension_numbers<[1], [0], [0], [1], [0, 0, 1, 1], [], []>} : vector<16x24xbf16>, vector<24x256xbf16>, vector<16x256xf32> -> vector<16x256xf32>
    %c0_78 = arith.constant 0 : index
    %c0_79 = arith.constant 0 : index
    %113 = vector.load %arg7[%c0_78, %c0_79] : memref<16x1xf32, #tpu.memory_space<vmem>>, vector<16x1xf32>
    %114 = vector.broadcast %113 : vector<16x1xf32> to vector<16x256xf32>
    %115 = arith.addf %112, %114 : vector<16x256xf32>
    %116 = vector.extract_strided_slice %115 {offsets = [0, 0], sizes = [8, 256], strides = [1, 1]} : vector<16x256xf32> to vector<8x256xf32>
    %117 = arith.negf %116 : vector<8x256xf32>
    %118 = math.exp %117 : vector<8x256xf32>
    %cst_80 = arith.constant 1.000000e+00 : f32
    %119 = vector.broadcast %cst_80 : f32 to vector<8x256xf32>
    %120 = arith.addf %119, %118 : vector<8x256xf32>
    %121 = arith.divf %119, %120 : vector<8x256xf32>
    %122 = vector.extract_strided_slice %115 {offsets = [8, 0], sizes = [8, 256], strides = [1, 1]} : vector<16x256xf32> to vector<8x256xf32>
    %123 = math.tanh %122 : vector<8x256xf32>
    %124 = arith.mulf %121, %123 : vector<8x256xf32>
    %125 = arith.truncf %124 : vector<8x256xf32> to vector<8x256xbf16>
    %c0_81 = arith.constant 0 : index
    %c0_82 = arith.constant 0 : index
    %126 = vector.load %arg8[%c0_81, %c0_82] : memref<16x8xbf16, #tpu.memory_space<vmem>>, vector<16x8xbf16>
    %cst_83 = arith.constant dense<0.000000e+00> : vector<16x256xf32>
    %127 = tpu.matmul %126, %125, %cst_83 {dimension_numbers = #tpu.dot_dimension_numbers<[1], [0], [0], [1], [0, 0, 1, 1], [], []>} : vector<16x8xbf16>, vector<8x256xbf16>, vector<16x256xf32> -> vector<16x256xf32>
    %c0_84 = arith.constant 0 : index
    %c0_85 = arith.constant 0 : index
    %128 = vector.load %arg9[%c0_84, %c0_85] : memref<16x1xf32, #tpu.memory_space<vmem>>, vector<16x1xf32>
    %129 = vector.broadcast %128 : vector<16x1xf32> to vector<16x256xf32>
    %130 = arith.addf %127, %129 : vector<16x256xf32>
    %131 = vector.extract_strided_slice %124 {offsets = [0, 0], sizes = [8, 128], strides = [1, 1]} : vector<8x256xf32> to vector<8x128xf32>
    %132 = vector.extract_strided_slice %130 {offsets = [0, 0], sizes = [8, 128], strides = [1, 1]} : vector<16x256xf32> to vector<8x128xf32>
    %133 = arith.addf %131, %132 : vector<8x128xf32>
    %cst_86 = arith.constant 0.707106769 : f32
    %134 = vector.broadcast %cst_86 : f32 to vector<8x128xf32>
    %135 = arith.mulf %133, %134 : vector<8x128xf32>
    %c0_87 = arith.constant 0 : index
    %c0_88 = arith.constant 0 : index
    %c0_89 = arith.constant 0 : index
    %136 = vector.load %arg10[%c0_87, %c0_88, %c0_89] : memref<2x8x128xf32, #tpu.memory_space<vmem>>, vector<1x8x128xf32>
    %137 = vector.shape_cast %136 : vector<1x8x128xf32> to vector<8x128xf32>
    %138 = vector.shape_cast %135 : vector<8x128xf32> to vector<1x8x128xf32>
    tpu.vector_store %arg10[%c0_87, %c0_88, %c0_89], %138 {strides = array<i32>} : memref<2x8x128xf32, #tpu.memory_space<vmem>>, vector<1x8x128xf32>,
    %139 = vector.extract_strided_slice %130 {offsets = [8, 0], sizes = [8, 128], strides = [1, 1]} : vector<16x256xf32> to vector<8x128xf32>
    %c0_90 = arith.constant 0 : index
    %c0_91 = arith.constant 0 : index
    %c0_92 = arith.constant 0 : index
    %140 = vector.load %arg11[%c0_90, %c0_91, %c0_92] : memref<2x8x128xf32, #tpu.memory_space<vmem>>, vector<1x8x128xf32>
    %141 = vector.shape_cast %140 : vector<1x8x128xf32> to vector<8x128xf32>
    %142 = vector.shape_cast %139 : vector<8x128xf32> to vector<1x8x128xf32>
    tpu.vector_store %arg11[%c0_90, %c0_91, %c0_92], %142 {strides = array<i32>} : memref<2x8x128xf32, #tpu.memory_space<vmem>>, vector<1x8x128xf32>,
    %143 = vector.extract_strided_slice %124 {offsets = [0, 128], sizes = [8, 128], strides = [1, 1]} : vector<8x256xf32> to vector<8x128xf32>
    %144 = vector.extract_strided_slice %130 {offsets = [0, 128], sizes = [8, 128], strides = [1, 1]} : vector<16x256xf32> to vector<8x128xf32>
    %145 = arith.addf %143, %144 : vector<8x128xf32>
    %cst_93 = arith.constant 0.707106769 : f32
    %146 = vector.broadcast %cst_93 : f32 to vector<8x128xf32>
    %147 = arith.mulf %145, %146 : vector<8x128xf32>
    %c1_94 = arith.constant 1 : index
    %c0_95 = arith.constant 0 : index
    %c0_96 = arith.constant 0 : index
    %148 = vector.load %arg10[%c1_94, %c0_95, %c0_96] : memref<2x8x128xf32, #tpu.memory_space<vmem>>, vector<1x8x128xf32>
    %149 = vector.shape_cast %148 : vector<1x8x128xf32> to vector<8x128xf32>
    %150 = vector.shape_cast %147 : vector<8x128xf32> to vector<1x8x128xf32>
    tpu.vector_store %arg10[%c1_94, %c0_95, %c0_96], %150 {strides = array<i32>} : memref<2x8x128xf32, #tpu.memory_space<vmem>>, vector<1x8x128xf32>,
    %151 = vector.extract_strided_slice %130 {offsets = [8, 128], sizes = [8, 128], strides = [1, 1]} : vector<16x256xf32> to vector<8x128xf32>
    %c1_97 = arith.constant 1 : index
    %c0_98 = arith.constant 0 : index
    %c0_99 = arith.constant 0 : index
    %152 = vector.load %arg11[%c1_97, %c0_98, %c0_99] : memref<2x8x128xf32, #tpu.memory_space<vmem>>, vector<1x8x128xf32>
    %153 = vector.shape_cast %152 : vector<1x8x128xf32> to vector<8x128xf32>
    %154 = vector.shape_cast %151 : vector<8x128xf32> to vector<1x8x128xf32>
    tpu.vector_store %arg11[%c1_97, %c0_98, %c0_99], %154 {strides = array<i32>} : memref<2x8x128xf32, #tpu.memory_space<vmem>>, vector<1x8x128xf32>,
    return
  }
  func.func @transform_0(%arg0: i32, %arg1: i32) -> (i32, i32, i32) {
    %c0_i32 = arith.constant 0 : i32
    %c0_i32_0 = arith.constant 0 : i32
    return %arg0, %c0_i32, %arg1 : i32, i32, i32
  }
  func.func @transform_1(%arg0: i32, %arg1: i32) -> (i32, i32, i32) {
    %c1_i32 = arith.constant 1 : i32
    %0 = arith.muli %arg1, %c1_i32 : i32
    %c1_i32_0 = arith.constant 1 : i32
    %1 = arith.subi %0, %c1_i32_0 : i32
    %c0_i32 = arith.constant 0 : i32
    %2 = arith.maxsi %1, %c0_i32 : i32
    %c0_i32_1 = arith.constant 0 : i32
    %c0_i32_2 = arith.constant 0 : i32
    return %arg0, %c0_i32_1, %2 : i32, i32, i32
  }
  func.func @transform_2(%arg0: i32, %arg1: i32) -> (i32, i32, i32) {
    %c1_i32 = arith.constant 1 : i32
    %0 = arith.addi %arg1, %c1_i32 : i32
    %c1_i32_0 = arith.constant 1 : i32
    %1 = arith.muli %0, %c1_i32_0 : i32
    %c2_i32 = arith.constant 2 : i32
    %2 = arith.minsi %1, %c2_i32 : i32
    %c0_i32 = arith.constant 0 : i32
    %c0_i32_1 = arith.constant 0 : i32
    return %arg0, %c0_i32, %2 : i32, i32, i32
  }
  func.func @transform_3(%arg0: i32, %arg1: i32) -> (i32, i32, i32) {
    %c0_i32 = arith.constant 0 : i32
    %c0_i32_0 = arith.constant 0 : i32
    %c0_i32_1 = arith.constant 0 : i32
    %c0_i32_2 = arith.constant 0 : i32
    return %c0_i32, %c0_i32_0, %c0_i32_1 : i32, i32, i32
  }
  func.func @transform_4(%arg0: i32, %arg1: i32) -> (i32, i32) {
    %c0_i32 = arith.constant 0 : i32
    %c0_i32_0 = arith.constant 0 : i32
    %c0_i32_1 = arith.constant 0 : i32
    return %c0_i32, %c0_i32_0 : i32, i32
  }
  func.func @transform_5(%arg0: i32, %arg1: i32) -> (i32, i32) {
    %c0_i32 = arith.constant 0 : i32
    %c0_i32_0 = arith.constant 0 : i32
    %c0_i32_1 = arith.constant 0 : i32
    return %c0_i32, %c0_i32_0 : i32, i32
  }
  func.func @transform_6(%arg0: i32, %arg1: i32) -> (i32, i32) {
    %c0_i32 = arith.constant 0 : i32
    %c0_i32_0 = arith.constant 0 : i32
    %c0_i32_1 = arith.constant 0 : i32
    return %c0_i32, %c0_i32_0 : i32, i32
  }
  func.func @transform_7(%arg0: i32, %arg1: i32) -> (i32, i32) {
    %c0_i32 = arith.constant 0 : i32
    %c0_i32_0 = arith.constant 0 : i32
    %c0_i32_1 = arith.constant 0 : i32
    return %c0_i32, %c0_i32_0 : i32, i32
  }
  func.func @transform_8(%arg0: i32, %arg1: i32) -> (i32, i32, i32) {
    %c0_i32 = arith.constant 0 : i32
    %c0_i32_0 = arith.constant 0 : i32
    return %arg0, %c0_i32, %arg1 : i32, i32, i32
  }
  func.func @transform_9(%arg0: i32, %arg1: i32) -> (i32, i32, i32) {
    %c0_i32 = arith.constant 0 : i32
    %c0_i32_0 = arith.constant 0 : i32
    return %arg0, %c0_i32, %arg1 : i32, i32, i32
  }
}

</mosaic_0001>

<llo_original>
// kernel: tpu_custom_call.1
$region0: #{tpu_custom_call.1}
  #allocation0 [shape = 'u32[]', space=smem, size = 0x4, offset = 0x4, fixed_abs, tag = 'smem constant byte address 0x4 - core index']
  #allocation1 [shape = 'u32[144,128]{1,0:T(1,128)}', space=vmem, size = 0x12000, scoped, tag = 'internal scratch']
  #allocation2 [shape = 'bf16[2,8,384]{2,1,0:T(8,128)(2,1)}', space=vmem, size = 0x3000, scoped, tag = 'scratch operand']
  #allocation3 [shape = 'bf16[24,256]{1,0:T(8,128)(2,1)}', space=vmem, size = 0x3000, scoped, tag = 'scratch operand']
  %s0 = inlined_call_operand.vmem [shape: f32[2,8,320], index: 0, kind: input, shape index: {}]
  %s1 = inlined_call_operand.hbm [shape: f32[2,8,320], index: 1, kind: input, shape index: {}]
  %s2 = inlined_call_operand.hbm [shape: f32[2,8,320], index: 2, kind: input, shape index: {}]
  %s3 = inlined_call_operand.vmem [shape: f32[2,8,1], index: 3, kind: input, shape index: {}]
  %s4 = inlined_call_operand.vmem [shape: bf16[16,24], index: 4, kind: input, shape index: {}]
  %s5 = inlined_call_operand.vmem [shape: f32[16,1], index: 5, kind: input, shape index: {}]
  %s6 = inlined_call_operand.vmem [shape: bf16[16,8], index: 6, kind: input, shape index: {}]
  %s7 = inlined_call_operand.vmem [shape: f32[16,1], index: 7, kind: input, shape index: {}]
  %s8 = inlined_call_operand.hbm [shape: f32[2,8,320], index: 8, kind: output, shape index: {0}]
  %s9 = inlined_call_operand.hbm [shape: f32[2,8,320], index: 9, kind: output, shape index: {1}]
  %10 = xla_tuple %s8, %s9
  %s11 = sld [smem:[#allocation0]]
  $region123: #{tpu_custom_call.1} parent=0
    _
  %s13 = ssub.s32 1, %s11
  %s14 = scalar_select 0, %s13, %s11
  $region1: #{tpu_custom_call.1} parent=0
    #allocation4 [shape = 'u8[16384]{0}', space=vmem, size = 0x4000, scoped, tag = 'input window, operand 0']
    #allocation5 [shape = 'u8[16384]{0}', space=vmem, size = 0x4000, scoped, tag = 'input window, operand 1']
    #allocation6 [shape = 's32[2]{0}', space=sflag, size = 0x8, scoped, tag = 'scoped memory for tpu_custom_call.1']
    #allocation7 [shape = 's32[2]{0}', space=sflag, size = 0x8, scoped, tag = 'scoped memory for tpu_custom_call.1']
    #allocation8 [shape = 'u8[16384]{0}', space=vmem, size = 0x4000, scoped, tag = 'input window, operand 2']
    #allocation9 [shape = 's32[2]{0}', space=sflag, size = 0x8, scoped, tag = 'scoped memory for tpu_custom_call.1']
    #allocation10 [shape = 'u8[16384]{0}', space=vmem, size = 0x4000, scoped, tag = 'output window, operand 0']
    #allocation11 [shape = 'u8[16384]{0}', space=vmem, size = 0x4000, scoped, tag = 'output window, operand 1']
    #allocation12 [shape = 's32[2]{0}', space=sflag, size = 0x8, scoped, tag = 'scoped memory for tpu_custom_call.1']
    %15 = vsyncpa [#allocation6], 0
    %s16 = scalar_lea.sflag [#allocation6], 1
    %17 = vsyncpa %s16, 0
    %18 = vsyncpa [#allocation9], 0
    %s19 = scalar_lea.sflag [#allocation9], 1
    %20 = vsyncpa %s19, 0
    %21 = vsyncpa [#allocation7], 0
    %s22 = scalar_lea.sflag [#allocation7], 1
    %23 = vsyncpa %s22, 0
    %24 = vsyncpa [#allocation12], 0
    %s25 = scalar_lea.sflag [#allocation12], 1
    %26 = vsyncpa %s25, 0
    loop: start=0, step=1, limit=5
    $region2: #{tpu_custom_call.1} parent=1 // loop_pre_header
      _
    $region3: #{tpu_custom_call.1} parent=1 // loop_header
      %s28 = sphi 0, %s32
      %p29 = scmp.ge.s32.totalorder %s28, 5
      %s35 = sphi 0, %s47
      %s36 = sphi 0, %s43
      %s37 = sphi 0, %s35
      %s38 = sphi 0, %s36
      %s39 = sphi 0, %s37
      %s40 = sphi 0, %s38
      %s52 = sphi 0, %s54
      %s55 = sphi 0, %s52
      %s56 = sphi 0, %s55
      %s72 = sphi 0, %s56
      %s86 = sphi 0, %s88
      %s89 = sphi 0, %s86
      %s90 = sphi 0, %s89
      %s106 = sphi 0, %s90
      %s120 = sphi 0, %s122
      %s123 = sphi 0, %s120
      %s124 = sphi 0, %s123
      %s140 = sphi 0, %s124
      %s144 = sphi 0, %s144
      %s146 = sphi 0, %s144
      %s147 = sphi 0, %s146
      %s161 = sphi 0, %s147
      %s165 = sphi 0, %s165
      %s167 = sphi 0, %s165
      %s168 = sphi 0, %s167
      %s182 = sphi 0, %s168
      %s186 = sphi 0, %s186
      %s188 = sphi 0, %s186
      %s189 = sphi 0, %s188
      %s203 = sphi 0, %s189
      %s207 = sphi 0, %s207
      %s209 = sphi 0, %s207
      %s210 = sphi 0, %s209
      %s224 = sphi 0, %s210
      %s228 = sphi 0, %s228
      %s230 = sphi 0, %s228
      %s231 = sphi 0, %s230
      %s245 = sphi 0, %s231
      %s253 = sphi 0, %s255
      %s256 = sphi 0, %s253
      %s257 = sphi 0, %s256
      %s273 = sphi 0, %s257
      %s281 = sphi 0, %s283
      %s284 = sphi 0, %s281
      %s285 = sphi 0, %s284
      %s301 = sphi 0, %s285
    $region4: #{tpu_custom_call.1} parent=1 // loop_header_branch
      %31 = sbr.rel (%p29) target = $region8
    $region5: #{tpu_custom_call.1} parent=1 // loop_body
      %s33 = ssub.s32 %s28, 1
      %s34 = ssub.s32 %s28, 2
      %s41 = sadd.s32 1, %s36
      %p42 = scmp.ge.s32.totalorder %s41, 3
      %s43 = scalar_select %p42, 0, %s41
      %s44 = sadd.s32 1, %s35
      %s45 = scalar_select %p42, %s44, %s35
      %p46 = scmp.ge.s32.totalorder %s45, 1
      %s47 = scalar_select %p46, 0, %s45
      %s48 = ssub.s32 %s35, %s47
      %s49 = ssub.s32 %s36, %s43
      %s50 = sor.u32 %s48, %s49
      %p51 = scmp.eq.s32.totalorder %s50, 0
      %s53 = sadd.s32 %s52, 1
      %s54 = scalar_select %p51, %s52, %s53
      %p57 = pneg %p51
      %p58 = scmp.eq.s32.totalorder %s28, 2
      %p59 = por %p57, %p58
      %p60 = scmp.ne.s32.totalorder %s52, %s55
      %p61 = scmp.eq.s32.totalorder %s28, 0
      %p62 = por %p60, %p61
      %p63 = scmp.ne.s32.totalorder %s52, %s55
      %p64 = scmp.eq.s32.totalorder %s33, 2
      %p65 = por %p63, %p64
      %p66 = scmp.ne.s32.totalorder %s55, %s56
      %p67 = scmp.eq.s32.totalorder %s33, 0
      %p68 = por %p66, %p67
      %p69 = scmp.ne.s32.totalorder %s55, %s56
      %p70 = scmp.eq.s32.totalorder %s34, 2
      %p71 = por %p69, %p70
      %p73 = scmp.ne.s32.totalorder %s56, %s72
      %p74 = scmp.eq.s32.totalorder %s34, 0
      %p75 = por %p73, %p74
      %s76 = ssub.s32 %s36, 1
      %p77 = scmp.gt.s32.totalorder %s76, 0
      %s78 = scalar_select %p77, %s76, 0
      %s79 = ssub.s32 %s43, 1
      %p80 = scmp.gt.s32.totalorder %s79, 0
      %s81 = scalar_select %p80, %s79, 0
      %s82 = ssub.s32 %s35, %s47
      %s83 = ssub.s32 %s78, %s81
      %s84 = sor.u32 %s82, %s83
      %p85 = scmp.eq.s32.totalorder %s84, 0
      %s87 = sadd.s32 %s86, 1
      %s88 = scalar_select %p85, %s86, %s87
      %p91 = pneg %p85
      %p92 = scmp.eq.s32.totalorder %s28, 2
      %p93 = por %p91, %p92
      %p94 = scmp.ne.s32.totalorder %s86, %s89
      %p95 = scmp.eq.s32.totalorder %s28, 0
      %p96 = por %p94, %p95
      %p97 = scmp.ne.s32.totalorder %s86, %s89
      %p98 = scmp.eq.s32.totalorder %s33, 2
      %p99 = por %p97, %p98
      %p100 = scmp.ne.s32.totalorder %s89, %s90
      %p101 = scmp.eq.s32.totalorder %s33, 0
      %p102 = por %p100, %p101
      %p103 = scmp.ne.s32.totalorder %s89, %s90
      %p104 = scmp.eq.s32.totalorder %s34, 2
      %p105 = por %p103, %p104
      %p107 = scmp.ne.s32.totalorder %s90, %s106
      %p108 = scmp.eq.s32.totalorder %s34, 0
      %p109 = por %p107, %p108
      %s110 = sadd.s32 %s36, 1
      %p111 = scmp.lt.s32.totalorder %s110, 2
      %s112 = scalar_select %p111, %s110, 2
      %s113 = sadd.s32 %s43, 1
      %p114 = scmp.lt.s32.totalorder %s113, 2
      %s115 = scalar_select %p114, %s113, 2
      %s116 = ssub.s32 %s35, %s47
      %s117 = ssub.s32 %s112, %s115
      %s118 = sor.u32 %s116, %s117
      %p119 = scmp.eq.s32.totalorder %s118, 0
      %s121 = sadd.s32 %s120, 1
      %s122 = scalar_select %p119, %s120, %s121
      %p125 = pneg %p119
      %p126 = scmp.eq.s32.totalorder %s28, 2
      %p127 = por %p125, %p126
      %p128 = scmp.ne.s32.totalorder %s120, %s123
      %p129 = scmp.eq.s32.totalorder %s28, 0
      %p130 = por %p128, %p129
      %p131 = scmp.ne.s32.totalorder %s120, %s123
      %p132 = scmp.eq.s32.totalorder %s33, 2
      %p133 = por %p131, %p132
      %p134 = scmp.ne.s32.totalorder %s123, %s124
      %p135 = scmp.eq.s32.totalorder %s33, 0
      %p136 = por %p134, %p135
      %p137 = scmp.ne.s32.totalorder %s123, %s124
      %p138 = scmp.eq.s32.totalorder %s34, 2
      %p139 = por %p137, %p138
      %p141 = scmp.ne.s32.totalorder %s124, %s140
      %p142 = scmp.eq.s32.totalorder %s34, 0
      %p143 = por %p141, %p142
      %s145 = sadd.s32 %s144, 1
      %p148 = scmp.eq.s32.totalorder %s28, 2
      %p149 = scmp.ne.s32.totalorder %s144, %s146
      %p150 = scmp.eq.s32.totalorder %s28, 0
      %p151 = por %p149, %p150
      %p152 = scmp.ne.s32.totalorder %s144, %s146
      %p153 = scmp.eq.s32.totalorder %s33, 2
      %p154 = por %p152, %p153
      %p155 = scmp.ne.s32.totalorder %s146, %s147
      %p156 = scmp.eq.s32.totalorder %s33, 0
      %p157 = por %p155, %p156
      %p158 = scmp.ne.s32.totalorder %s146, %s147
      %p159 = scmp.eq.s32.totalorder %s34, 2
      %p160 = por %p158, %p159
      %p162 = scmp.ne.s32.totalorder %s147, %s161
      %p163 = scmp.eq.s32.totalorder %s34, 0
      %p164 = por %p162, %p163
      %s166 = sadd.s32 %s165, 1
      %p169 = scmp.eq.s32.totalorder %s28, 2
      %p170 = scmp.ne.s32.totalorder %s165, %s167
      %p171 = scmp.eq.s32.totalorder %s28, 0
      %p172 = por %p170, %p171
      %p173 = scmp.ne.s32.totalorder %s165, %s167
      %p174 = scmp.eq.s32.totalorder %s33, 2
      %p175 = por %p173, %p174
      %p176 = scmp.ne.s32.totalorder %s167, %s168
      %p177 = scmp.eq.s32.totalorder %s33, 0
      %p178 = por %p176, %p177
      %p179 = scmp.ne.s32.totalorder %s167, %s168
      %p180 = scmp.eq.s32.totalorder %s34, 2
      %p181 = por %p179, %p180
      %p183 = scmp.ne.s32.totalorder %s168, %s182
      %p184 = scmp.eq.s32.totalorder %s34, 0
      %p185 = por %p183, %p184
      %s187 = sadd.s32 %s186, 1
      %p190 = scmp.eq.s32.totalorder %s28, 2
      %p191 = scmp.ne.s32.totalorder %s186, %s188
      %p192 = scmp.eq.s32.totalorder %s28, 0
      %p193 = por %p191, %p192
      %p194 = scmp.ne.s32.totalorder %s186, %s188
      %p195 = scmp.eq.s32.totalorder %s33, 2
      %p196 = por %p194, %p195
      %p197 = scmp.ne.s32.totalorder %s188, %s189
      %p198 = scmp.eq.s32.totalorder %s33, 0
      %p199 = por %p197, %p198
      %p200 = scmp.ne.s32.totalorder %s188, %s189
      %p201 = scmp.eq.s32.totalorder %s34, 2
      %p202 = por %p200, %p201
      %p204 = scmp.ne.s32.totalorder %s189, %s203
      %p205 = scmp.eq.s32.totalorder %s34, 0
      %p206 = por %p204, %p205
      %s208 = sadd.s32 %s207, 1
      %p211 = scmp.eq.s32.totalorder %s28, 2
      %p212 = scmp.ne.s32.totalorder %s207, %s209
      %p213 = scmp.eq.s32.totalorder %s28, 0
      %p214 = por %p212, %p213
      %p215 = scmp.ne.s32.totalorder %s207, %s209
      %p216 = scmp.eq.s32.totalorder %s33, 2
      %p217 = por %p215, %p216
      %p218 = scmp.ne.s32.totalorder %s209, %s210
      %p219 = scmp.eq.s32.totalorder %s33, 0
      %p220 = por %p218, %p219
      %p221 = scmp.ne.s32.totalorder %s209, %s210
      %p222 = scmp.eq.s32.totalorder %s34, 2
      %p223 = por %p221, %p222
      %p225 = scmp.ne.s32.totalorder %s210, %s224
      %p226 = scmp.eq.s32.totalorder %s34, 0
      %p227 = por %p225, %p226
      %s229 = sadd.s32 %s228, 1
      %p232 = scmp.eq.s32.totalorder %s28, 2
      %p233 = scmp.ne.s32.totalorder %s228, %s230
      %p234 = scmp.eq.s32.totalorder %s28, 0
      %p235 = por %p233, %p234
      %p236 = scmp.ne.s32.totalorder %s228, %s230
      %p237 = scmp.eq.s32.totalorder %s33, 2
      %p238 = por %p236, %p237
      %p239 = scmp.ne.s32.totalorder %s230, %s231
      %p240 = scmp.eq.s32.totalorder %s33, 0
      %p241 = por %p239, %p240
      %p242 = scmp.ne.s32.totalorder %s230, %s231
      %p243 = scmp.eq.s32.totalorder %s34, 2
      %p244 = por %p242, %p243
      %p246 = scmp.ne.s32.totalorder %s231, %s245
      %p247 = scmp.eq.s32.totalorder %s34, 0
      %p248 = por %p246, %p247
      %s249 = ssub.s32 %s35, %s47
      %s250 = ssub.s32 %s36, %s43
      %s251 = sor.u32 %s249, %s250
      %p252 = scmp.eq.s32.totalorder %s251, 0
      %s254 = sadd.s32 %s253, 1
      %s255 = scalar_select %p252, %s253, %s254
      %p258 = pneg %p252
      %p259 = scmp.eq.s32.totalorder %s28, 2
      %p260 = por %p258, %p259
      %p261 = scmp.ne.s32.totalorder %s253, %s256
      %p262 = scmp.eq.s32.totalorder %s28, 0
      %p263 = por %p261, %p262
      %p264 = scmp.ne.s32.totalorder %s253, %s256
      %p265 = scmp.eq.s32.totalorder %s33, 2
      %p266 = por %p264, %p265
      %p267 = scmp.ne.s32.totalorder %s256, %s257
      %p268 = scmp.eq.s32.totalorder %s33, 0
      %p269 = por %p267, %p268
      %p270 = scmp.ne.s32.totalorder %s256, %s257
      %p271 = scmp.eq.s32.totalorder %s34, 2
      %p272 = por %p270, %p271
      %p274 = scmp.ne.s32.totalorder %s257, %s273
      %p275 = scmp.eq.s32.totalorder %s34, 0
      %p276 = por %p274, %p275
      %s277 = ssub.s32 %s35, %s47
      %s278 = ssub.s32 %s36, %s43
      %s279 = sor.u32 %s277, %s278
      %p280 = scmp.eq.s32.totalorder %s279, 0
      %s282 = sadd.s32 %s281, 1
      %s283 = scalar_select %p280, %s281, %s282
      %p286 = pneg %p280
      %p287 = scmp.eq.s32.totalorder %s28, 2
      %p288 = por %p286, %p287
      %p289 = scmp.ne.s32.totalorder %s281, %s284
      %p290 = scmp.eq.s32.totalorder %s28, 0
      %p291 = por %p289, %p290
      %p292 = scmp.ne.s32.totalorder %s281, %s284
      %p293 = scmp.eq.s32.totalorder %s33, 2
      %p294 = por %p292, %p293
      %p295 = scmp.ne.s32.totalorder %s284, %s285
      %p296 = scmp.eq.s32.totalorder %s33, 0
      %p297 = por %p295, %p296
      %p298 = scmp.ne.s32.totalorder %s284, %s285
      %p299 = scmp.eq.s32.totalorder %s34, 2
      %p300 = por %p298, %p299
      %p302 = scmp.ne.s32.totalorder %s285, %s301
      %p303 = scmp.eq.s32.totalorder %s34, 0
      %p304 = por %p302, %p303
      %p305 = scmp.le.s32.totalorder 1, %s28
      %p306 = scmp.lt.s32.totalorder %s28, 4
      %p307 = pnand %p305, %p306
      %p308 = pneg %p307
      // Predicated region
      $region9: #{tpu_custom_call.1} parent=5 // pred_check
        _
      $region10: #{tpu_custom_call.1} parent=5 // pred_check_branch
        %310 = sbr.rel (%p307) target = $region12
      $region11: #{tpu_custom_call.1} parent=5 // pred_region
        %s311 = ssub.s32 %s28, 1
        // Predicated region
        $region13: #{tpu_custom_call.1} parent=11 // pred_check
          %p312 = pneg %p157
        $region14: #{tpu_custom_call.1} parent=11 // pred_check_branch
          %314 = sbr.rel (%p312) target = $region16
        $region15: #{tpu_custom_call.1} parent=11 // pred_region
          _
        $region16: #{tpu_custom_call.1} parent=11 // pred_fallthru
          _
        // Predicated region
        $region17: #{tpu_custom_call.1} parent=11 // pred_check
          %p315 = pneg %p178
        $region18: #{tpu_custom_call.1} parent=11 // pred_check_branch
          %317 = sbr.rel (%p315) target = $region20
        $region19: #{tpu_custom_call.1} parent=11 // pred_region
          _
        $region20: #{tpu_custom_call.1} parent=11 // pred_fallthru
          _
        // Predicated region
        $region21: #{tpu_custom_call.1} parent=11 // pred_check
          %p318 = pneg %p199
        $region22: #{tpu_custom_call.1} parent=11 // pred_check_branch
          %320 = sbr.rel (%p318) target = $region24
        $region23: #{tpu_custom_call.1} parent=11 // pred_region
          _
        $region24: #{tpu_custom_call.1} parent=11 // pred_fallthru
          _
        // Predicated region
        $region25: #{tpu_custom_call.1} parent=11 // pred_check
          %p321 = pneg %p220
        $region26: #{tpu_custom_call.1} parent=11 // pred_check_branch
          %323 = sbr.rel (%p321) target = $region28
        $region27: #{tpu_custom_call.1} parent=11 // pred_region
          _
        $region28: #{tpu_custom_call.1} parent=11 // pred_fallthru
          _
        // Predicated region
        $region29: #{tpu_custom_call.1} parent=11 // pred_check
          %p324 = pneg %p241
        $region30: #{tpu_custom_call.1} parent=11 // pred_check_branch
          %326 = sbr.rel (%p324) target = $region32
        $region31: #{tpu_custom_call.1} parent=11 // pred_region
          _
        $region32: #{tpu_custom_call.1} parent=11 // pred_fallthru
          _
      $region12: #{tpu_custom_call.1} parent=5 // pred_fallthru
        _
      %p327 = scmp.lt.s32.totalorder %s28, 3
      // Predicated region
      $region33: #{tpu_custom_call.1} parent=5 // pred_check
        %p328 = pneg %p327
      $region34: #{tpu_custom_call.1} parent=5 // pred_check_branch
        %330 = sbr.rel (%p328) target = $region36
      $region35: #{tpu_custom_call.1} parent=5 // pred_region
        // Predicated region
        $region37: #{tpu_custom_call.1} parent=35 // pred_check
          %p331 = pneg %p62
        $region38: #{tpu_custom_call.1} parent=35 // pred_check_branch
          %333 = sbr.rel (%p331) target = $region40
        $region39: #{tpu_custom_call.1} parent=35 // pred_region
          %s334 = sand.u32 %s52, 1
          %s335 = sand.u32 %s52, 1
          %s336 = smul.addr %s335, 16
          %s337 = scalar_lea.vmem [#allocation4], %s336
          %s338 = smul.u32 2, %s35
          %s339 = smul.addr %s338, 3
          %s340 = sadd.s32 %s36, %s339
          %s341 = smul.addr %s340, 8
          %s342 = scalar_lea.vmem %s0, %s341
          // Predicated region
          $region41: #{tpu_custom_call.1} parent=39 // pred_check
            _
          $region42: #{tpu_custom_call.1} parent=39 // pred_check_branch
            %344 = sbr.rel (0) target = $region44
          $region43: #{tpu_custom_call.1} parent=39 // pred_region
            // Predicated region
            $region45: #{tpu_custom_call.1} parent=43 // pred_check
              _
            $region46: #{tpu_custom_call.1} parent=43 // pred_check_branch
              %346 = sbr.rel (0) target = $region48
            $region47: #{tpu_custom_call.1} parent=43 // pred_region
              // Predicated region
              $region60: #{tpu_custom_call.1} parent=47 // pred_check
                _
              $region61: #{tpu_custom_call.1} parent=47 // pred_check_branch
                %363 = sbr.rel (0) target = $region63
              $region62: #{tpu_custom_call.1} parent=47 // pred_region
                loop: start=0, step=1, limit=1
                $region64: #{tpu_custom_call.1} parent=62 // loop_pre_header
                  _
                $region65: #{tpu_custom_call.1} parent=62 // loop_header
                  %s365 = sphi 0, %s369
                  %p366 = scmp.ge.s32.totalorder %s365, 1
                  %s370 = sphi %s342, %s342
                  %s371 = sphi %s337, %s337
                $region66: #{tpu_custom_call.1} parent=62 // loop_header_branch
                  %368 = sbr.rel (%p366) target = $region70
                $region67: #{tpu_custom_call.1} parent=62 // loop_body
                  %v372 = vld [vmem:[%s370] sm:$0xff]
                  %373 = vst [vmem:[%s371] sm:$0xff] %v372
                  %v374 = vld [vmem:[%s370 + $0x18] sm:$0xff]
                  %375 = vst [vmem:[%s371 + $0x8] sm:$0xff] %v374
                $region68: #{tpu_custom_call.1} parent=62 // loop_footer
                  %s369 = sadd.s32 1, %s365
                $region69: #{tpu_custom_call.1} parent=62 // loop_footer_branch
                  %364 = sbr.rel target = $region65
                $region70: #{tpu_custom_call.1} parent=62 // loop_exit
                  _
              $region63: #{tpu_custom_call.1} parent=47 // pred_fallthru
                _
              // Predicated region
              $region71: #{tpu_custom_call.1} parent=47 // pred_check
                _
              $region72: #{tpu_custom_call.1} parent=47 // pred_check_branch
                %377 = sbr.rel target = $region74
              $region73: #{tpu_custom_call.1} parent=47 // pred_region
                _
              $region74: #{tpu_custom_call.1} parent=47 // pred_fallthru
                _
            $region48: #{tpu_custom_call.1} parent=43 // pred_fallthru
              _
            // Predicated region
            $region49: #{tpu_custom_call.1} parent=43 // pred_check
              _
            $region50: #{tpu_custom_call.1} parent=43 // pred_check_branch
              %348 = sbr.rel target = $region52
            $region51: #{tpu_custom_call.1} parent=43 // pred_region
              loop: start=0, step=1, limit=1
              $region53: #{tpu_custom_call.1} parent=51 // loop_pre_header
                _
              $region54: #{tpu_custom_call.1} parent=51 // loop_header
                %s351 = sphi 0, %s355
                %p352 = scmp.ge.s32.totalorder %s351, 1
                %s356 = sphi %s342, %s342
                %s357 = sphi %s337, %s337
              $region55: #{tpu_custom_call.1} parent=51 // loop_header_branch
                %354 = sbr.rel (%p352) target = $region59
              $region56: #{tpu_custom_call.1} parent=51 // loop_body
                %v358 = vld [vmem:[%s356] sm:$0xff]
                %359 = vst [vmem:[%s357] sm:$0xff] %v358
                %v360 = vld [vmem:[%s356 + $0x18] sm:$0xff]
                %361 = vst [vmem:[%s357 + $0x8] sm:$0xff] %v360
              $region57: #{tpu_custom_call.1} parent=51 // loop_footer
                %s355 = sadd.s32 1, %s351
              $region58: #{tpu_custom_call.1} parent=51 // loop_footer_branch
                %350 = sbr.rel target = $region54
              $region59: #{tpu_custom_call.1} parent=51 // loop_exit
                _
            $region52: #{tpu_custom_call.1} parent=43 // pred_fallthru
              _
          $region44: #{tpu_custom_call.1} parent=39 // pred_fallthru
            _
          %378 = vnop
        $region40: #{tpu_custom_call.1} parent=35 // pred_fallthru
          _
        // Predicated region
        $region75: #{tpu_custom_call.1} parent=35 // pred_check
          %p379 = pneg %p96
        $region76: #{tpu_custom_call.1} parent=35 // pred_check_branch
          %381 = sbr.rel (%p379) target = $region78
        $region77: #{tpu_custom_call.1} parent=35 // pred_region
          %s382 = sand.u32 %s86, 1
          %s383 = scalar_lea.sflag [#allocation6], %s382
          %s384 = sand.u32 %s86, 1
          %s385 = smul.addr %s384, 16
          %s386 = scalar_lea.vmem [#allocation5], %s385
          %s387 = ssub.s32 %s36, 1
          %p388 = scmp.gt.s32.totalorder %s387, 0
          %s389 = scalar_select %p388, %s387, 0
          %s390 = smul.u32 2, %s35
          %s392 = ssub.s32 256, 256
          %393 = vsyncadd %s383, %s392
          %s394 = smul.addr %s390, 3
          %s395 = sadd.s32 %s389, %s394
          %s396 = smul.addr %s395, 128
          %s397 = scalar_lea.hbm %s1, %s396
          %s398 = sshll.u32 %s386, 4
          %s399 = int_to_ptr.vmem [resolvable:$true] %s398
          %404 = dma.hbm_to_vmem [thread:$0]  %s397, 256, %s399, %s383, 384, 128, 8
        $region78: #{tpu_custom_call.1} parent=35 // pred_fallthru
          _
        // Predicated region
        $region79: #{tpu_custom_call.1} parent=35 // pred_check
          %p405 = pneg %p130
        $region80: #{tpu_custom_call.1} parent=35 // pred_check_branch
          %407 = sbr.rel (%p405) target = $region82
        $region81: #{tpu_custom_call.1} parent=35 // pred_region
          %s408 = sand.u32 %s120, 1
          %s409 = scalar_lea.sflag [#allocation9], %s408
          %s410 = sand.u32 %s120, 1
          %s411 = smul.addr %s410, 16
          %s412 = scalar_lea.vmem [#allocation8], %s411
          %s413 = sadd.s32 %s36, 1
          %p414 = scmp.lt.s32.totalorder %s413, 2
          %s415 = scalar_select %p414, %s413, 2
          %s416 = smul.u32 2, %s35
          %s418 = ssub.s32 256, 256
          %419 = vsyncadd %s409, %s418
          %s420 = smul.addr %s416, 3
          %s421 = sadd.s32 %s415, %s420
          %s422 = smul.addr %s421, 128
          %s423 = scalar_lea.hbm %s2, %s422
          %s424 = sshll.u32 %s412, 4
          %s425 = int_to_ptr.vmem [resolvable:$true] %s424
          %430 = dma.hbm_to_vmem [thread:$0]  %s423, 256, %s425, %s409, 384, 128, 8
        $region82: #{tpu_custom_call.1} parent=35 // pred_fallthru
          _
      $region36: #{tpu_custom_call.1} parent=5 // pred_fallthru
        _
      %p431 = scmp.le.s32.totalorder 1, %s28
      %p432 = scmp.lt.s32.totalorder %s28, 4
      %p433 = pnand %p431, %p432
      %p434 = pneg %p433
      // Predicated region
      $region83: #{tpu_custom_call.1} parent=5 // pred_check
        _
      $region84: #{tpu_custom_call.1} parent=5 // pred_check_branch
        %436 = sbr.rel (%p433) target = $region86
      $region85: #{tpu_custom_call.1} parent=5 // pred_region
        %s437 = ssub.s32 %s28, 1
        %s438 = sand.u32 %s55, 1
        %s439 = sand.u32 %s55, 1
        %s440 = smul.addr %s439, 16
        %s441 = scalar_lea.vmem [#allocation4], %s440
        // Predicated region
        $region87: #{tpu_custom_call.1} parent=85 // pred_check
          %p442 = pneg %p68
        $region88: #{tpu_custom_call.1} parent=85 // pred_check_branch
          %444 = sbr.rel (%p442) target = $region90
        $region89: #{tpu_custom_call.1} parent=85 // pred_region
          _
        $region90: #{tpu_custom_call.1} parent=85 // pred_fallthru
          _
        %s445 = sand.u32 %s89, 1
        %s446 = scalar_lea.sflag [#allocation6], %s445
        %s447 = sand.u32 %s89, 1
        %s448 = smul.addr %s447, 16
        %s449 = scalar_lea.vmem [#allocation5], %s448
        // Predicated region
        $region91: #{tpu_custom_call.1} parent=85 // pred_check
          %p450 = pneg %p102
        $region92: #{tpu_custom_call.1} parent=85 // pred_check_branch
          %452 = sbr.rel (%p450) target = $region94
        $region93: #{tpu_custom_call.1} parent=85 // pred_region
          %453 = dma.done %s446, 256
        $region94: #{tpu_custom_call.1} parent=85 // pred_fallthru
          _
        %s454 = sand.u32 %s123, 1
        %s455 = scalar_lea.sflag [#allocation9], %s454
        %s456 = sand.u32 %s123, 1
        %s457 = smul.addr %s456, 16
        %s458 = scalar_lea.vmem [#allocation8], %s457
        // Predicated region
        $region95: #{tpu_custom_call.1} parent=85 // pred_check
          %p459 = pneg %p136
        $region96: #{tpu_custom_call.1} parent=85 // pred_check_branch
          %461 = sbr.rel (%p459) target = $region98
        $region97: #{tpu_custom_call.1} parent=85 // pred_region
          %462 = dma.done %s455, 256
        $region98: #{tpu_custom_call.1} parent=85 // pred_fallthru
          _
        %s463 = sand.u32 %s55, 1
        %s464 = sand.u32 %s55, 1
        %s465 = smul.addr %s464, 16
        %s466 = scalar_lea.vmem [#allocation4], %s465
        %p467 = pneg %p68
        %p468 = pneg %p65
        %s469 = sand.u32 %s89, 1
        %s470 = scalar_lea.sflag [#allocation6], %s469
        %s471 = sand.u32 %s89, 1
        %s472 = smul.addr %s471, 16
        %s473 = scalar_lea.vmem [#allocation5], %s472
        %p474 = pneg %p102
        %p475 = pneg %p99
        %s476 = sand.u32 %s123, 1
        %s477 = scalar_lea.sflag [#allocation9], %s476
        %s478 = sand.u32 %s123, 1
        %s479 = smul.addr %s478, 16
        %s480 = scalar_lea.vmem [#allocation8], %s479
        %p481 = pneg %p136
        %p482 = pneg %p133
        %p483 = pneg %p157
        %p484 = pneg %p154
        %p485 = pneg %p178
        %p486 = pneg %p175
        %p487 = pneg %p199
        %p488 = pneg %p196
        %p489 = pneg %p220
        %p490 = pneg %p217
        %p491 = pneg %p241
        %p492 = pneg %p238
        %p493 = pneg %p269
        %p494 = pneg %p266
        %s495 = sand.u32 %s256, 1
        %s496 = scalar_lea.sflag [#allocation7], %s495
        %s497 = sand.u32 %s256, 1
        %s498 = smul.addr %s497, 16
        %s499 = scalar_lea.vmem [#allocation10], %s498
        %p500 = pneg %p297
        %p501 = pneg %p294
        %s502 = sand.u32 %s284, 1
        %s503 = scalar_lea.sflag [#allocation12], %s502
        %s504 = sand.u32 %s284, 1
        %s505 = smul.addr %s504, 16
        %s506 = scalar_lea.vmem [#allocation11], %s505
        %s507 = smul.u32 2, %s37
        %s508 = ssub.s32 %s38, 1
        %p509 = scmp.gt.s32.totalorder %s508, 0
        %s510 = scalar_select %p509, %s508, 0
        %s511 = smul.u32 2, %s37
        %s512 = sadd.s32 %s38, 1
        %p513 = scmp.lt.s32.totalorder %s512, 2
        %s514 = scalar_select %p513, %s512, 2
        %s515 = smul.u32 2, %s37
        %s516 = smul.u32 2, %s37
        %s517 = smul.u32 2, %s37
        %s519 = smul.u32 %s37, 2
        %s520 = smul.u32 %s519, 8
        %s521 = scalar_lea.vmem %s3, %s520
        %v522 = vld [vmem:[%s521] sm:$0xff]
        %v523 = vld [vmem:[%s441] sm:$0xff]
        %525 = vset.pattern.permute.xlu0 0
        %526 = vperm.xlu0 %525, %v522
        %v527 = vpop.permute.xlu0 %526
        %v529 = vadd.f32 %v523, %v527
        %v530 = vpack.c.bf16 %v529, %v529
        %531 = vst [vmem:[#allocation2 + $0x4] sm:$0xf] %v530
        %v532 = vld [vmem:[%s449] sm:$0xff]
        %p533 = scmp.gt.s32.totalorder %s38, 0
        %v534 = vadd.f32 %v532, %v527
        %s535 = scalar_select %p533, 1, 0
        %v536 = vstv %s535
        %vm537 = vcmp.eq.s32.totalorder %v536, 1
        %v538 = vsel %vm537, %v534, 0.0
        %v539 = vpack.c.bf16 %v538, %v538
        %vm540 = vcmask 1044464
        %541 = vst.msk [vmem:[#allocation2] sm:$0xf] %vm540, %v539
        %v542 = vld [vmem:[%s458] sm:$0xff]
        %v543 = vlaneseq
        %v544 = vand.u32 %v543, 127
        %s545 = sadd.s32 %s38, 1
        %s546 = smul.u32 %s545, 128
        %v547 = vstv %s546
        %v548 = vadd.s32 %v544, %v547
        %vm549 = vcmp.lt.s32.totalorder %v548, 320
        %v550 = vadd.f32 %v542, %v527
        %v551 = vsel %vm549, 1, 0
        %vm552 = vcmp.eq.s32.totalorder %v551, 1
        %v553 = vsel %vm552, %v550, 0.0
        %v554 = vpack.c.bf16 %v553, %v553
        %vm555 = vcmask 11264
        %556 = vst.msk [vmem:[#allocation2 + $0x8] sm:$0xf] %vm555, %v554
        %s557 = sadd.s32 %s519, 1
        %s558 = smul.u32 %s557, 8
        %s559 = scalar_lea.vmem %s3, %s558
        %v560 = vld [vmem:[%s559] sm:$0xff]
        %s561 = scalar_lea.vmem %s441, 8 [#allocation4]
        %v562 = vld [vmem:[%s561] sm:$0xff]
        %564 = vset.pattern.permute.xlu0 0
        %565 = vperm.xlu0 %564, %v560
        %v566 = vpop.permute.xlu0 %565
        %v568 = vadd.f32 %v562, %v566
        %v569 = vpack.c.bf16 %v568, %v568
        %s570 = scalar_lea.vmem [#allocation2], 12
        %571 = vst [vmem:[%s570 + $0x4] sm:$0xf] %v569
        %s572 = scalar_lea.vmem %s449, 8 [#allocation5]
        %v573 = vld [vmem:[%s572] sm:$0xff]
        %v574 = vadd.f32 %v573, %v566
        %v575 = vsel %vm537, %v574, 0.0
        %v576 = vpack.c.bf16 %v575, %v575
        %577 = vst.msk [vmem:[%s570] sm:$0xf] %vm540, %v576
        %s578 = scalar_lea.vmem %s458, 8 [#allocation8]
        %v579 = vld [vmem:[%s578] sm:$0xff]
        %v580 = vadd.f32 %v579, %v566
        %v581 = vsel %vm552, %v580, 0.0
        %v582 = vpack.c.bf16 %v581, %v581
        %583 = vst.msk [vmem:[%s570 + $0x8] sm:$0xf] %vm555, %v582
        %p584 = scmp.eq.s32.totalorder %s38, 2
        // Predicated region
        $region99: #{tpu_custom_call.1} parent=85 // pred_check
          %p585 = pneg %p584
        $region100: #{tpu_custom_call.1} parent=85 // pred_check_branch
          %587 = sbr.rel (%p585) target = $region102
        $region101: #{tpu_custom_call.1} parent=85 // pred_region
          %vm588 = vcmask 1043968
          %589 = vst.msk [vmem:[#allocation2 + $0x4] sm:$0xf] %vm588, 0
          %590 = vst.msk [vmem:[#allocation2 + $0x10] sm:$0xf] %vm588, 0
        $region102: #{tpu_custom_call.1} parent=85 // pred_fallthru
          _
        %v591 = vld [vmem:[#allocation2] sm:$0xff]
        %593 = vrot.lane.b32.xlu0 %v591, 2
        %v594 = vpop.permute.xlu0 %593
        %v595 = vrot.slane %v594, 4
        %vm596 = vcmask 15360
        %v597 = vsel %vm596, %v594, %v595
        %599 = vst [vmem:[#allocation3] sm:$0xf] %v597
        %v600 = vld [vmem:[#allocation2 + $0x4] sm:$0xf]
        %601 = vst [vmem:[#allocation3 + $0x8] sm:$0xf] %v600
        %v602 = vld [vmem:[#allocation2 + $0x4] sm:$0xff]
        %604 = vrot.lane.b32.xlu0 %v602, 126
        %v605 = vpop.permute.xlu0 %604
        %v606 = vrot.slane %v605, 4
        %vm607 = vcmask 1031168
        %v608 = vsel %vm607, %v605, %v606
        %610 = vst [vmem:[#allocation3 + $0x10] sm:$0xf] %v608
        %v611 = vld [vmem:[%s570] sm:$0xff]
        %613 = vrot.lane.b32.xlu0 %v611, 2
        %v614 = vpop.permute.xlu0 %613
        %v615 = vrot.slane %v614, 4
        %v616 = vsel %vm596, %v614, %v615
        %618 = vst [vmem:[#allocation3 + $0x4] sm:$0xf] %v616
        %v619 = vld [vmem:[%s570 + $0x4] sm:$0xf]
        %620 = vst [vmem:[#allocation3 + $0xc] sm:$0xf] %v619
        %v621 = vld [vmem:[%s570 + $0x4] sm:$0xff]
        %623 = vrot.lane.b32.xlu0 %v621, 126
        %v624 = vpop.permute.xlu0 %623
        %v625 = vrot.slane %v624, 4
        %v626 = vsel %vm607, %v624, %v625
        %628 = vst [vmem:[#allocation3 + $0x14] sm:$0xf] %v626
        %v629 = vld [vmem:[%s4] sm:$0xf]
        %v630 = vld [vmem:[%s4 + $0x4] sm:$0xf]
        %v631 = vld [vmem:[#allocation3] sm:$0xff]
        %v632 = vld [vmem:[#allocation3 + $0x8] sm:$0xff]
        %v633 = vld [vmem:[#allocation3 + $0x10] sm:$0xff]
        %v634 = vld [vmem:[%s5] sm:$0xff]
        %v635 = vld [vmem:[%s5 + $0x8] sm:$0xff]
        %637 = vset.pattern.permute.xlu0 0
        %638 = vperm.xlu0 %637, %v634
        %v639 = vpop.permute.xlu0 %638
        %642 = vset.pattern.permute.xlu0 0
        %643 = vperm.xlu0 %642, %v635
        %v644 = vpop.permute.xlu0 %643
        %v648 = vunpack.c.l.b16 %v629
        %v649 = vunpack.c.l.b16 %v630
        %v650 = vpack.c.b16 %v649, %v648
        %v654 = vunpack.c.l.b16 %v631
        %v655 = vunpack.c.h.b16 %v631
        %v656 = vunpack.c.l.b16 %v632
        %v657 = vunpack.c.h.b16 %v632
        %v658 = vunpack.c.l.b16 %v633
        %v659 = vunpack.c.h.b16 %v633
        %v660 = vpack.c.b16 %v656, %v654
        %v661 = vpack.c.b16 %v657, %v655
        %v662 = vpack.c.b16 %v658, %v658
        %v663 = vpack.c.b16 %v659, %v659
        %vm666 = vcmask 195584
        %v668 = vsel %vm666, %v650, 0
        %vm670 = vcmask 1043456
        %v672 = vsel %vm670, %v662, 0
        %v675 = vsel %vm670, %v663, 0
        %677 = vmatprep.subr.bf16.mxu0 %v661
        %678 = vmatpush1.bf16.msra.mxu0 %v660
        %679 = vmatprep.subr.bf16.mxu0 %v675
        %680 = vmatpush1.bf16.msra.mxu0 %v672
        %681 = vmatprep.subr.bf16.mxu0 0
        %682 = vmatpush1.bf16.msra.mxu0 0
        %683 = vmatprep.subr.bf16.mxu0 0
        %684 = vmatpush1.bf16.msra.mxu0 0
        %685 = vmatprep.subr.bf16.mxu0 0
        %686 = vmatpush1.bf16.msra.mxu0 0
        %687 = vmatprep.subr.bf16.mxu0 0
        %688 = vmatpush1.bf16.msra.mxu0 0
        %689 = vmatprep.subr.bf16.mxu0 0
        %690 = vmatpush1.bf16.msra.mxu0 0
        %691 = vmatprep.subr.bf16.mxu0 0
        %692 = vmatpush1.bf16.msra.mxu0 0
        %693 = vmatprep.subr.bf16.mxu0 0
        %694 = vmatpush1.bf16.msra.mxu0 0
        %695 = vmatprep.subr.bf16.mxu0 0
        %696 = vmatpush1.bf16.msra.mxu0 0
        %697 = vmatprep.subr.bf16.mxu0 0
        %698 = vmatpush1.bf16.msra.mxu0 0
        %699 = vmatprep.subr.bf16.mxu0 0
        %700 = vmatpush1.bf16.msra.mxu0 0
        %701 = vmatprep.subr.bf16.mxu0 0
        %702 = vmatpush1.bf16.msra.mxu0 0
        %703 = vmatprep.subr.bf16.mxu0 0
        %704 = vmatpush1.bf16.msra.mxu0 0
        %705 = vmatprep.subr.bf16.mxu0 0
        %706 = vmatpush1.bf16.msra.mxu0 0
        %707 = vmatprep.subr.bf16.mxu0 0
        %708 = vmatpush1.bf16.msra.mxu0 0
        %709 = vmatprep.mubr.bf16.mxu0 0
        %710 = vmatmul.mubr.bf16.gmra.mrb[0].mxu0 %v668
        %v711 = vpop.f32.mrb[0].mxu0
        %v712 = vadd.f32 %v639, %v711
        %v713 = vpop.f32.mrb[0].mxu0
        %v714 = vadd.f32 %v639, %v713
        %v715 = vpop.f32.mrb[0].mxu0
        %v716 = vadd.f32 %v644, %v715
        %v717 = vpop.f32.mrb[0].mxu0
        %v718 = vadd.f32 %v644, %v717
        %719 = vdwg.mxu0
        %v720 = vxor.u32 %v712, 2147483648
        %v721 = vxor.u32 %v714, 2147483648
        %v722 = vmul.f32 %v720, 1.442695
        %v723 = vpow.pop %v722
        %v724 = vmul.f32 %v721, 1.442695
        %v725 = vpow.pop %v724
        %v726 = vadd.f32 %v723, 1.0
        %v727 = vadd.f32 %v725, 1.0
        %v728 = vrcp.pop %v726
        %v729 = vmul.f32 1.0, %v728
        %v730 = vrcp.pop %v727
        %v731 = vmul.f32 1.0, %v730
        %v732 = vtanh.pop %v716
        %v733 = vtanh.pop %v718
        %v734 = vmul.f32 %v729, %v732
        %v735 = vmul.f32 %v731, %v733
        %v736 = vpack.c.bf16 %v734, %v734
        %v737 = vpack.c.bf16 %v735, %v735
        %v738 = vld [vmem:[%s6] sm:$0xf]
        %v739 = vld [vmem:[%s6 + $0x4] sm:$0xf]
        %v740 = vld [vmem:[%s7] sm:$0xff]
        %v741 = vld [vmem:[%s7 + $0x8] sm:$0xff]
        %743 = vset.pattern.permute.xlu0 0
        %744 = vperm.xlu0 %743, %v740
        %v745 = vpop.permute.xlu0 %744
        %748 = vset.pattern.permute.xlu0 0
        %749 = vperm.xlu0 %748, %v741
        %v750 = vpop.permute.xlu0 %749
        %v754 = vunpack.c.l.b16 %v738
        %v755 = vunpack.c.l.b16 %v739
        %v756 = vpack.c.b16 %v755, %v754
        %vm757 = vcmask 64512
        %v759 = vsel %vm757, %v756, 0
        %v762 = vsel %vm670, %v736, 0
        %v765 = vsel %vm670, %v737, 0
        %767 = vmatprep.subr.bf16.mxu0 %v765
        %768 = vmatpush1.bf16.msra.mxu0 %v762
        %769 = vmatprep.subr.bf16.mxu0 0
        %770 = vmatpush1.bf16.msra.mxu0 0
        %771 = vmatprep.subr.bf16.mxu0 0
        %772 = vmatpush1.bf16.msra.mxu0 0
        %773 = vmatprep.subr.bf16.mxu0 0
        %774 = vmatpush1.bf16.msra.mxu0 0
        %775 = vmatprep.subr.bf16.mxu0 0
        %776 = vmatpush1.bf16.msra.mxu0 0
        %777 = vmatprep.subr.bf16.mxu0 0
        %778 = vmatpush1.bf16.msra.mxu0 0
        %779 = vmatprep.subr.bf16.mxu0 0
        %780 = vmatpush1.bf16.msra.mxu0 0
        %781 = vmatprep.subr.bf16.mxu0 0
        %782 = vmatpush1.bf16.msra.mxu0 0
        %783 = vmatprep.subr.bf16.mxu0 0
        %784 = vmatpush1.bf16.msra.mxu0 0
        %785 = vmatprep.subr.bf16.mxu0 0
        %786 = vmatpush1.bf16.msra.mxu0 0
        %787 = vmatprep.subr.bf16.mxu0 0
        %788 = vmatpush1.bf16.msra.mxu0 0
        %789 = vmatprep.subr.bf16.mxu0 0
        %790 = vmatpush1.bf16.msra.mxu0 0
        %791 = vmatprep.subr.bf16.mxu0 0
        %792 = vmatpush1.bf16.msra.mxu0 0
        %793 = vmatprep.subr.bf16.mxu0 0
        %794 = vmatpush1.bf16.msra.mxu0 0
        %795 = vmatprep.subr.bf16.mxu0 0
        %796 = vmatpush1.bf16.msra.mxu0 0
        %797 = vmatprep.subr.bf16.mxu0 0
        %798 = vmatpush1.bf16.msra.mxu0 0
        %799 = vmatprep.mubr.bf16.mxu0 0
        %800 = vmatmul.mubr.bf16.gmra.mrb[0].mxu0 %v759
        %v801 = vpop.f32.mrb[0].mxu0
        %v802 = vadd.f32 %v745, %v801
        %v803 = vpop.f32.mrb[0].mxu0
        %v804 = vadd.f32 %v745, %v803
        %v805 = vpop.f32.mrb[0].mxu0
        %v806 = vadd.f32 %v750, %v805
        %v807 = vpop.f32.mrb[0].mxu0
        %v808 = vadd.f32 %v750, %v807
        %809 = vdwg.mxu0
        %v810 = vadd.f32 %v734, %v802
        %v811 = vmul.f32 %v810, 0.70710677
        %812 = vst [vmem:[%s499] sm:$0xff] %v811
        %813 = vst [vmem:[%s506] sm:$0xff] %v806
        %v814 = vadd.f32 %v735, %v804
        %v815 = vmul.f32 %v814, 0.70710677
        %s816 = scalar_lea.vmem %s499, 8 [#allocation10]
        %817 = vst [vmem:[%s816] sm:$0xff] %v815
        %s818 = scalar_lea.vmem %s506, 8 [#allocation11]
        %819 = vst [vmem:[%s818] sm:$0xff] %v808
        %s820 = sand.u32 %s256, 1
        %s821 = scalar_lea.sflag [#allocation7], %s820
        %s822 = sand.u32 %s256, 1
        %s823 = smul.addr %s822, 16
        %s824 = scalar_lea.vmem [#allocation10], %s823
        %s825 = sand.u32 %s284, 1
        %s826 = scalar_lea.sflag [#allocation12], %s825
        %s827 = sand.u32 %s284, 1
        %s828 = smul.addr %s827, 16
        %s829 = scalar_lea.vmem [#allocation11], %s828
        // Predicated region
        $region103: #{tpu_custom_call.1} parent=85 // pred_check
          %p830 = pneg %p266
        $region104: #{tpu_custom_call.1} parent=85 // pred_check_branch
          %832 = sbr.rel (%p830) target = $region106
        $region105: #{tpu_custom_call.1} parent=85 // pred_region
          %s833 = smul.u32 2, %s37
          %s835 = ssub.s32 256, 256
          %836 = vsyncadd %s821, %s835
          %s837 = smul.addr %s833, 3
          %s838 = sadd.s32 %s38, %s837
          %s839 = smul.addr %s838, 128
          %s840 = scalar_lea.hbm %s8, %s839
          %s841 = sshll.u32 %s824, 4
          %s842 = int_to_ptr.vmem [resolvable:$true] %s841
          %847 = dma.vmem_to_hbm [thread:$0]  %s842, 256, %s840, %s821, 128, 384, 8
        $region106: #{tpu_custom_call.1} parent=85 // pred_fallthru
          _
        // Predicated region
        $region107: #{tpu_custom_call.1} parent=85 // pred_check
          %p848 = pneg %p294
        $region108: #{tpu_custom_call.1} parent=85 // pred_check_branch
          %850 = sbr.rel (%p848) target = $region110
        $region109: #{tpu_custom_call.1} parent=85 // pred_region
          %s851 = smul.u32 2, %s37
          %s853 = ssub.s32 256, 256
          %854 = vsyncadd %s826, %s853
          %s855 = smul.addr %s851, 3
          %s856 = sadd.s32 %s38, %s855
          %s857 = smul.addr %s856, 128
          %s858 = scalar_lea.hbm %s9, %s857
          %s859 = sshll.u32 %s829, 4
          %s860 = int_to_ptr.vmem [resolvable:$true] %s859
          %865 = dma.vmem_to_hbm [thread:$0]  %s860, 256, %s858, %s826, 128, 384, 8
        $region110: #{tpu_custom_call.1} parent=85 // pred_fallthru
          _
      $region86: #{tpu_custom_call.1} parent=5 // pred_fallthru
        _
      %p866 = scmp.le.s32.totalorder 2, %s28
      // Predicated region
      $region111: #{tpu_custom_call.1} parent=5 // pred_check
        %p867 = pneg %p866
      $region112: #{tpu_custom_call.1} parent=5 // pred_check_branch
        %869 = sbr.rel (%p867) target = $region114
      $region113: #{tpu_custom_call.1} parent=5 // pred_region
        %s870 = ssub.s32 %s28, 2
        // Predicated region
        $region115: #{tpu_custom_call.1} parent=113 // pred_check
          %p871 = pneg %p272
        $region116: #{tpu_custom_call.1} parent=113 // pred_check_branch
          %873 = sbr.rel (%p871) target = $region118
        $region117: #{tpu_custom_call.1} parent=113 // pred_region
          %s874 = sand.u32 %s257, 1
          %s875 = scalar_lea.sflag [#allocation7], %s874
          %s876 = sand.u32 %s257, 1
          %s877 = smul.addr %s876, 16
          %s878 = scalar_lea.vmem [#allocation10], %s877
          %879 = dma.done %s875, 256
        $region118: #{tpu_custom_call.1} parent=113 // pred_fallthru
          _
        // Predicated region
        $region119: #{tpu_custom_call.1} parent=113 // pred_check
          %p880 = pneg %p300
        $region120: #{tpu_custom_call.1} parent=113 // pred_check_branch
          %882 = sbr.rel (%p880) target = $region122
        $region121: #{tpu_custom_call.1} parent=113 // pred_region
          %s883 = sand.u32 %s285, 1
          %s884 = scalar_lea.sflag [#allocation12], %s883
          %s885 = sand.u32 %s285, 1
          %s886 = smul.addr %s885, 16
          %s887 = scalar_lea.vmem [#allocation11], %s886
          %888 = dma.done %s884, 256
        $region122: #{tpu_custom_call.1} parent=113 // pred_fallthru
          _
      $region114: #{tpu_custom_call.1} parent=5 // pred_fallthru
        _
    $region6: #{tpu_custom_call.1} parent=1 // loop_footer
      %s32 = sadd.s32 1, %s28
    $region7: #{tpu_custom_call.1} parent=1 // loop_footer_branch
      %27 = sbr.rel target = $region3
    $region8: #{tpu_custom_call.1} parent=1 // loop_exit
      _
    %889 = vsyncpa [#allocation6], 1
    %s890 = scalar_lea.sflag [#allocation6], 1
    %891 = vsyncpa %s890, 1
    %892 = vsyncpa [#allocation9], 1
    %s893 = scalar_lea.sflag [#allocation9], 1
    %894 = vsyncpa %s893, 1
    %895 = vsyncpa [#allocation7], 1
    %s896 = scalar_lea.sflag [#allocation7], 1
    %897 = vsyncpa %s896, 1
    %898 = vsyncpa [#allocation12], 1
    %s899 = scalar_lea.sflag [#allocation12], 1
    %900 = vsyncpa %s899, 1

</llo_original>
